<compile_context>
chip_gen: v5e
topology: v5e:2x2
jax: 0.10.0
libtpu: 0.0.40
codegen_flags: <defaults>
</compile_context>

<pallas_src>
import jax
import jax.numpy as jnp
from jax.experimental import pallas as pl
from jax.experimental.pallas import tpu as pltpu

IN_DIM, H1_DIM, H2_DIM, H3_DIM, OUT_DIM = 784, 500, 200, 100, 10


def mlp_kernel(x_ref, w1_ref, b1_ref, w2_ref, b2_ref, w3_ref, b3_ref, o_ref):
    x = x_ref[...]
    if x.dtype != jnp.bfloat16:            # cast only if producer gave f32
        x = x.astype(jnp.bfloat16)

    # layer_1 + ReLU : (TB, 784) @ (784, 500) -> (TB, 500), f32 accumulate
    h1 = jnp.dot(x, w1_ref[...], preferred_element_type=jnp.float32) + b1_ref[...]
    h1 = jnp.maximum(h1, 0.0).astype(jnp.bfloat16)

    # layer_2 + ReLU : (TB, 500) @ (500, 200) -> (TB, 200)
    h2 = jnp.dot(h1, w2_ref[...], preferred_element_type=jnp.float32) + b2_ref[...]
    h2 = jnp.maximum(h2, 0.0).astype(jnp.bfloat16)

    # layer_3 with the group-sum folded into the weights: (TB, 200) @ (200, 10)
    y = jnp.dot(h2, w3_ref[...], preferred_element_type=jnp.float32) + b3_ref[...]
    o_ref[...] = y.astype(o_ref.dtype)


def _cdiv(a, b):
    return -(-a // b)


def _round_up(x, m):
    return _cdiv(x, m) * m


def _choose_tile_b(B, tile_b_max):
    """Batch tile: multiples of 256, aiming for grid >= 2 (v7x megacore).

    Small batches fall back to a single exact full-batch tile (full-dim block
    is always layout-legal and needs no boundary masking).
    """
    half = (B + 1) // 2
    tile = min(tile_b_max, _round_up(half, 256))
    if tile >= B:
        tile = B
    return tile


def _resident_spec(block_shape):
    """BlockSpec for an operand whose block never changes across the grid."""
    ndim = len(block_shape)
    index_map = lambda i, _n=ndim: (0,) * _n
    if hasattr(pl, "Buffered"):
        try:
            return pl.BlockSpec(block_shape, index_map,
                                pipeline_mode=pl.Buffered(1))
        except TypeError:
            pass  # older BlockSpec signature: fall back to default buffering
    return pl.BlockSpec(block_shape, index_map)


def fold_and_cast_params(w1, b1, w2, b2, w3, b3):
    """Fold view(B,10,10).sum(2) into layer 3 and cast weights to bf16.

    Weights are pre-transposed to (in, out); biases are (1, out).
    """
    # G[k, i] = 1 iff k // 10 == i  ->  reproduces reshape(B, 10, 10).sum(axis=2)
    g = (
        jnp.arange(H3_DIM)[:, None] // OUT_DIM == jnp.arange(OUT_DIM)[None, :]
    ).astype(jnp.float32)
    w3f = w3 @ g  # (200, 10)
    b3f = b3 @ g  # (1, 10)
    return (
        w1.astype(jnp.bfloat16),
        b1.astype(jnp.float32),
        w2.astype(jnp.bfloat16),
        b2.astype(jnp.float32),
        w3f.astype(jnp.bfloat16),
        b3f.astype(jnp.float32),
    )


def simple_linear_control(x, w1, b1, w2, b2, w3f, b3f, *,
                          tile_b_max=512, out_dtype=jnp.float32):
    """x: (B, 784) f32 or bf16.  Weights bf16 (in, out); w3/b3 already folded."""
    B = x.shape[0]
    tile_b = _choose_tile_b(B, tile_b_max)
    grid = (_cdiv(B, tile_b),)

    flops = 2 * B * (IN_DIM * H1_DIM + H1_DIM * H2_DIM + H2_DIM * OUT_DIM)
    bytes_accessed = (
        x.size * x.dtype.itemsize
        + sum(a.size * a.dtype.itemsize for a in (w1, b1, w2, b2, w3f, b3f))
        + B * OUT_DIM * jnp.dtype(out_dtype).itemsize
    )

    return pl.pallas_call(
        mlp_kernel,
        out_shape=jax.ShapeDtypeStruct((B, OUT_DIM), out_dtype),
        grid_spec=pltpu.PrefetchScalarGridSpec(
            num_scalar_prefetch=0,
            grid=grid,
            in_specs=[
                pl.BlockSpec((tile_b, IN_DIM), lambda i: (i, 0)),  # x tile (streamed)
                _resident_spec((IN_DIM, H1_DIM)),                  # w1 (VMEM-resident)
                _resident_spec((1, H1_DIM)),                       # b1
                _resident_spec((H1_DIM, H2_DIM)),                  # w2
                _resident_spec((1, H2_DIM)),                       # b2
                _resident_spec((H2_DIM, OUT_DIM)),                 # w3' (folded)
                _resident_spec((1, OUT_DIM)),                      # b3' (folded)
            ],
            out_specs=pl.BlockSpec((tile_b, OUT_DIM), lambda i: (i, 0)),
        ),
        compiler_params=pltpu.CompilerParams(
            dimension_semantics=("parallel",),
            vmem_limit_bytes=32 * 1024 * 1024,
        ),
        cost_estimate=pl.CostEstimate(
            flops=flops, transcendentals=0, bytes_accessed=bytes_accessed
        ),
    )(x, w1, b1, w2, b2, w3f, b3f)


def _init_linear(key, fan_in, fan_out):
    # PyTorch nn.Linear default init: U(-1/sqrt(fan_in), 1/sqrt(fan_in))
    kw, kb = jax.random.split(key)
    bound = 1.0 / jnp.sqrt(fan_in)
    w = jax.random.uniform(kw, (fan_in, fan_out), jnp.float32, -bound, bound)
    b = jax.random.uniform(kb, (1, fan_out), jnp.float32, -bound, bound)
    return w, b


if __name__ == "__main__":
    key = jax.random.PRNGKey(0)
    kx, k1, k2, k3 = jax.random.split(key, 4)

    B = 8
    x = jax.random.normal(kx, (B, IN_DIM), jnp.float32)

    w1, b1 = _init_linear(k1, IN_DIM, H1_DIM)
    w2, b2 = _init_linear(k2, H1_DIM, H2_DIM)
    w3, b3 = _init_linear(k3, H2_DIM, H3_DIM)

    params = fold_and_cast_params(w1, b1, w2, b2, w3, b3)
    out = simple_linear_control(x, *params)
    out = jax.block_until_ready(out)
    assert out.shape == (B, OUT_DIM)

    # Tight check: pure-JAX reference of the exact kernel computation
    # (same bf16 casts, same folded layer-3 weights).
    w1b, b1f, w2b, b2f, w3b, b3f = params
    h = jnp.dot(x.astype(jnp.bfloat16), w1b, preferred_element_type=jnp.float32) + b1f
    h = jnp.maximum(h, 0.0)
    h = jnp.dot(h.astype(jnp.bfloat16), w2b, preferred_element_type=jnp.float32) + b2f
    h = jnp.maximum(h, 0.0)
    ref_bf16 = (
        jnp.dot(h.astype(jnp.bfloat16), w3b, preferred_element_type=jnp.float32) + b3f
    )
    assert jnp.allclose(out, ref_bf16, atol=2e-3, rtol=2e-3), "tight check failed"

    # Loose semantic check vs the original f32 module (relu->relu->linear,
    # reshape(B,10,10).sum(2)); tolerance covers bf16 quantization only.
    ref = jnp.maximum(x @ w1 + b1, 0.0)
    ref = jnp.maximum(ref @ w2 + b2, 0.0)
    ref = ref @ w3 + b3
    ref = ref.reshape(B, 10, 10).sum(axis=2)
    assert jnp.allclose(out, ref, atol=2e-1, rtol=5e-2), "semantic check failed"

    print("KERNEL_OK")
</pallas_src>

<mosaic_0001>
module attributes {stable_mosaic.version = 11 : i64} {
  func.func @mlp_kernel(%arg0: i32, %arg1: memref<8x784xf32, #tpu.memory_space<vmem>>, %arg2: memref<784x500xbf16, #tpu.memory_space<vmem>>, %arg3: memref<1x500xf32, #tpu.memory_space<vmem>>, %arg4: memref<500x200xbf16, #tpu.memory_space<vmem>>, %arg5: memref<1x200xf32, #tpu.memory_space<vmem>>, %arg6: memref<200x10xbf16, #tpu.memory_space<vmem>>, %arg7: memref<1x10xf32, #tpu.memory_space<vmem>>, %arg8: memref<8x10xf32, #tpu.memory_space<vmem>>) attributes {dimension_semantics = [#tpu.dimension_semantics<parallel>], iteration_bounds = array<i64: 1>, scalar_prefetch = 0 : i64, scratch_operands = 0 : i64, tpu.core_type = #tpu.core_type<tc>, window_params = [{transform_indices = @transform_0, window_bounds = array<i64: 8, 784>}, {pipeline_mode = #tpu.pipeline_mode<synchronous>, transform_indices = @transform_1, window_bounds = array<i64: 784, 500>}, {pipeline_mode = #tpu.pipeline_mode<synchronous>, transform_indices = @transform_2, window_bounds = array<i64: 1, 500>}, {pipeline_mode = #tpu.pipeline_mode<synchronous>, transform_indices = @transform_3, window_bounds = array<i64: 500, 200>}, {pipeline_mode = #tpu.pipeline_mode<synchronous>, transform_indices = @transform_4, window_bounds = array<i64: 1, 200>}, {pipeline_mode = #tpu.pipeline_mode<synchronous>, transform_indices = @transform_5, window_bounds = array<i64: 200, 10>}, {pipeline_mode = #tpu.pipeline_mode<synchronous>, transform_indices = @transform_6, window_bounds = array<i64: 1, 10>}, {transform_indices = @transform_7, window_bounds = array<i64: 8, 10>}]} {
    %c0 = arith.constant 0 : index
    %c0_0 = arith.constant 0 : index
    %0 = vector.load %arg1[%c0, %c0_0] : memref<8x784xf32, #tpu.memory_space<vmem>>, vector<8x784xf32>
    %1 = arith.truncf %0 : vector<8x784xf32> to vector<8x784xbf16>
    %c0_1 = arith.constant 0 : index
    %c0_2 = arith.constant 0 : index
    %2 = vector.load %arg2[%c0_1, %c0_2] : memref<784x500xbf16, #tpu.memory_space<vmem>>, vector<784x500xbf16>
    %cst = arith.constant dense<0.000000e+00> : vector<8x500xf32>
    %3 = tpu.matmul %1, %2, %cst {dimension_numbers = #tpu.dot_dimension_numbers<[1], [0], [0], [1], [0, 0, 1, 1], [], []>} : vector<8x784xbf16>, vector<784x500xbf16>, vector<8x500xf32> -> vector<8x500xf32>
    %c0_3 = arith.constant 0 : index
    %c0_4 = arith.constant 0 : index
    %4 = vector.load %arg3[%c0_3, %c0_4] : memref<1x500xf32, #tpu.memory_space<vmem>>, vector<1x500xf32>
    %5 = vector.broadcast %4 : vector<1x500xf32> to vector<8x500xf32>
    %6 = arith.addf %3, %5 : vector<8x500xf32>
    %cst_5 = arith.constant 0.000000e+00 : f32
    %7 = vector.broadcast %cst_5 : f32 to vector<8x500xf32>
    %8 = arith.maximumf %6, %7 : vector<8x500xf32>
    %9 = arith.truncf %8 : vector<8x500xf32> to vector<8x500xbf16>
    %c0_6 = arith.constant 0 : index
    %c0_7 = arith.constant 0 : index
    %10 = vector.load %arg4[%c0_6, %c0_7] : memref<500x200xbf16, #tpu.memory_space<vmem>>, vector<500x200xbf16>
    %cst_8 = arith.constant dense<0.000000e+00> : vector<8x200xf32>
    %11 = tpu.matmul %9, %10, %cst_8 {dimension_numbers = #tpu.dot_dimension_numbers<[1], [0], [0], [1], [0, 0, 1, 1], [], []>} : vector<8x500xbf16>, vector<500x200xbf16>, vector<8x200xf32> -> vector<8x200xf32>
    %c0_9 = arith.constant 0 : index
    %c0_10 = arith.constant 0 : index
    %12 = vector.load %arg5[%c0_9, %c0_10] : memref<1x200xf32, #tpu.memory_space<vmem>>, vector<1x200xf32>
    %13 = vector.broadcast %12 : vector<1x200xf32> to vector<8x200xf32>
    %14 = arith.addf %11, %13 : vector<8x200xf32>
    %cst_11 = arith.constant 0.000000e+00 : f32
    %15 = vector.broadcast %cst_11 : f32 to vector<8x200xf32>
    %16 = arith.maximumf %14, %15 : vector<8x200xf32>
    %17 = arith.truncf %16 : vector<8x200xf32> to vector<8x200xbf16>
    %c0_12 = arith.constant 0 : index
    %c0_13 = arith.constant 0 : index
    %18 = vector.load %arg6[%c0_12, %c0_13] : memref<200x10xbf16, #tpu.memory_space<vmem>>, vector<200x10xbf16>
    %cst_14 = arith.constant dense<0.000000e+00> : vector<8x10xf32>
    %19 = tpu.matmul %17, %18, %cst_14 {dimension_numbers = #tpu.dot_dimension_numbers<[1], [0], [0], [1], [0, 0, 1, 1], [], []>} : vector<8x200xbf16>, vector<200x10xbf16>, vector<8x10xf32> -> vector<8x10xf32>
    %c0_15 = arith.constant 0 : index
    %c0_16 = arith.constant 0 : index
    %20 = vector.load %arg7[%c0_15, %c0_16] : memref<1x10xf32, #tpu.memory_space<vmem>>, vector<1x10xf32>
    %21 = vector.broadcast %20 : vector<1x10xf32> to vector<8x10xf32>
    %22 = arith.addf %19, %21 : vector<8x10xf32>
    %c0_17 = arith.constant 0 : index
    %c0_18 = arith.constant 0 : index
    %23 = vector.load %arg8[%c0_17, %c0_18] : memref<8x10xf32, #tpu.memory_space<vmem>>, vector<8x10xf32>
    tpu.vector_store %arg8[%c0_17, %c0_18], %22 {strides = array<i32>} : memref<8x10xf32, #tpu.memory_space<vmem>>, vector<8x10xf32>,
    return
  }
  func.func @transform_0(%arg0: i32) -> (i32, i32) {
    %c0_i32 = arith.constant 0 : i32
    %c0_i32_0 = arith.constant 0 : i32
    return %arg0, %c0_i32 : i32, i32
  }
  func.func @transform_1(%arg0: i32) -> (i32, i32) {
    %c0_i32 = arith.constant 0 : i32
    %c0_i32_0 = arith.constant 0 : i32
    %c0_i32_1 = arith.constant 0 : i32
    return %c0_i32, %c0_i32_0 : i32, i32
  }
  func.func @transform_2(%arg0: i32) -> (i32, i32) {
    %c0_i32 = arith.constant 0 : i32
    %c0_i32_0 = arith.constant 0 : i32
    %c0_i32_1 = arith.constant 0 : i32
    return %c0_i32, %c0_i32_0 : i32, i32
  }
  func.func @transform_3(%arg0: i32) -> (i32, i32) {
    %c0_i32 = arith.constant 0 : i32
    %c0_i32_0 = arith.constant 0 : i32
    %c0_i32_1 = arith.constant 0 : i32
    return %c0_i32, %c0_i32_0 : i32, i32
  }
  func.func @transform_4(%arg0: i32) -> (i32, i32) {
    %c0_i32 = arith.constant 0 : i32
    %c0_i32_0 = arith.constant 0 : i32
    %c0_i32_1 = arith.constant 0 : i32
    return %c0_i32, %c0_i32_0 : i32, i32
  }
  func.func @transform_5(%arg0: i32) -> (i32, i32) {
    %c0_i32 = arith.constant 0 : i32
    %c0_i32_0 = arith.constant 0 : i32
    %c0_i32_1 = arith.constant 0 : i32
    return %c0_i32, %c0_i32_0 : i32, i32
  }
  func.func @transform_6(%arg0: i32) -> (i32, i32) {
    %c0_i32 = arith.constant 0 : i32
    %c0_i32_0 = arith.constant 0 : i32
    %c0_i32_1 = arith.constant 0 : i32
    return %c0_i32, %c0_i32_0 : i32, i32
  }
  func.func @transform_7(%arg0: i32) -> (i32, i32) {
    %c0_i32 = arith.constant 0 : i32
    %c0_i32_0 = arith.constant 0 : i32
    return %arg0, %c0_i32 : i32, i32
  }
}

</mosaic_0001>

<llo_original>
// kernel: tpu_custom_call.1
$region0: #{tpu_custom_call.1}
  #allocation0 [shape = 'u32[]', space=smem, size = 0x4, offset = 0x4, fixed_abs, tag = 'smem constant byte address 0x4 - core index']
  #allocation1 [shape = 'u32[72,128]{1,0:T(1,128)}', space=vmem, size = 0x9000, scoped, tag = 'internal scratch']
  %s0 = inlined_call_operand.vmem [shape: f32[8,784], index: 0, kind: input, shape index: {}]
  %s1 = inlined_call_operand.hbm [shape: bf16[784,500], index: 1, kind: input, shape index: {}]
  %s2 = inlined_call_operand.vmem [shape: f32[1,500], index: 2, kind: input, shape index: {}]
  %s3 = inlined_call_operand.vmem [shape: bf16[500,200], index: 3, kind: input, shape index: {}]
  %s4 = inlined_call_operand.vmem [shape: f32[1,200], index: 4, kind: input, shape index: {}]
  %s5 = inlined_call_operand.vmem [shape: bf16[200,10], index: 5, kind: input, shape index: {}]
  %s6 = inlined_call_operand.vmem [shape: f32[1,10], index: 6, kind: input, shape index: {}]
  %s7 = inlined_call_operand.hbm [shape: f32[8,10], index: 7, kind: output, shape index: {}]
  %s8 = sld [smem:[#allocation0]]
  $region42: #{tpu_custom_call.1} parent=0
    _
  %s10 = ssub.s32 1, %s8
  %s11 = scalar_select 0, %s10, %s8
  $region1: #{tpu_custom_call.1} parent=0
    #allocation2 [shape = 'u8[802816]{0}', space=vmem, size = 0xc4000, scoped, tag = 'input window, operand 1, single buffered']
    #allocation3 [shape = 's32[1]{0}', space=sflag, size = 0x4, scoped, tag = 'scoped memory for tpu_custom_call.1']
    #allocation4 [shape = 's32[1]{0}', space=sflag, size = 0x4, scoped, tag = 'scoped memory for tpu_custom_call.1']
    #allocation5 [shape = 'u8[4096]{0}', space=vmem, size = 0x1000, scoped, tag = 'output window, operand 0, single buffered']
    %12 = vsyncpa [#allocation3], 0
    %13 = vsyncpa [#allocation4], 0
    // Predicated region
    $region2: #{tpu_custom_call.1} parent=1 // pred_check
      _
    $region3: #{tpu_custom_call.1} parent=1 // pred_check_branch
      %15 = sbr.rel (0) target = $region5
    $region4: #{tpu_custom_call.1} parent=1 // pred_region
      _
    $region5: #{tpu_custom_call.1} parent=1 // pred_fallthru
      _
    // Predicated region
    $region6: #{tpu_custom_call.1} parent=1 // pred_check
      _
    $region7: #{tpu_custom_call.1} parent=1 // pred_check_branch
      %17 = sbr.rel (0) target = $region9
    $region8: #{tpu_custom_call.1} parent=1 // pred_region
      %19 = vsyncadd [#allocation3], 0
      %s20 = sshll.u32 %s1, 4
      %s21 = int_to_ptr.hbm [resolvable:$true] %s20
      %s22 = sshll.u32 [#allocation2], 4
      %s23 = int_to_ptr.vmem [resolvable:$true] %s22
      %28 = dma.hbm_to_vmem [thread:$0]  %s21, 25088, %s23, [#allocation3], 256, 256, 16
    $region9: #{tpu_custom_call.1} parent=1 // pred_fallthru
      _
    // Predicated region
    $region10: #{tpu_custom_call.1} parent=1 // pred_check
      _
    $region11: #{tpu_custom_call.1} parent=1 // pred_check_branch
      %30 = sbr.rel (0) target = $region13
    $region12: #{tpu_custom_call.1} parent=1 // pred_region
      _
    $region13: #{tpu_custom_call.1} parent=1 // pred_fallthru
      _
    // Predicated region
    $region14: #{tpu_custom_call.1} parent=1 // pred_check
      _
    $region15: #{tpu_custom_call.1} parent=1 // pred_check_branch
      %32 = sbr.rel (0) target = $region17
    $region16: #{tpu_custom_call.1} parent=1 // pred_region
      _
    $region17: #{tpu_custom_call.1} parent=1 // pred_fallthru
      _
    // Predicated region
    $region18: #{tpu_custom_call.1} parent=1 // pred_check
      _
    $region19: #{tpu_custom_call.1} parent=1 // pred_check_branch
      %34 = sbr.rel (0) target = $region21
    $region20: #{tpu_custom_call.1} parent=1 // pred_region
      _
    $region21: #{tpu_custom_call.1} parent=1 // pred_fallthru
      _
    // Predicated region
    $region22: #{tpu_custom_call.1} parent=1 // pred_check
      _
    $region23: #{tpu_custom_call.1} parent=1 // pred_check_branch
      %36 = sbr.rel (0) target = $region25
    $region24: #{tpu_custom_call.1} parent=1 // pred_region
      _
    $region25: #{tpu_custom_call.1} parent=1 // pred_fallthru
      _
    // Predicated region
    $region26: #{tpu_custom_call.1} parent=1 // pred_check
      _
    $region27: #{tpu_custom_call.1} parent=1 // pred_check_branch
      %38 = sbr.rel (0) target = $region29
    $region28: #{tpu_custom_call.1} parent=1 // pred_region
      _
    $region29: #{tpu_custom_call.1} parent=1 // pred_fallthru
      _
    // Predicated region
    $region30: #{tpu_custom_call.1} parent=1 // pred_check
      _
    $region31: #{tpu_custom_call.1} parent=1 // pred_check_branch
      %40 = sbr.rel (0) target = $region33
    $region32: #{tpu_custom_call.1} parent=1 // pred_region
      %42 = dma.done [#allocation3], 25088
    $region33: #{tpu_custom_call.1} parent=1 // pred_fallthru
      _
    %v44 = vld [vmem:[%s0] sm:$0xff]
    %v45 = vld [vmem:[%s0 + $0x8] sm:$0xff]
    %v46 = vld [vmem:[%s0 + $0x10] sm:$0xff]
    %v47 = vld [vmem:[%s0 + $0x18] sm:$0xff]
    %v48 = vld [vmem:[%s0 + $0x20] sm:$0xff]
    %v49 = vld [vmem:[%s0 + $0x28] sm:$0xff]
    %v50 = vld [vmem:[%s0 + $0x30] sm:$0xff]
    %v51 = vpack.c.bf16 %v44, %v44
    %v52 = vpack.c.bf16 %v45, %v45
    %v53 = vpack.c.bf16 %v46, %v46
    %v54 = vpack.c.bf16 %v47, %v47
    %v55 = vpack.c.bf16 %v48, %v48
    %v56 = vpack.c.bf16 %v49, %v49
    %v57 = vpack.c.bf16 %v50, %v50
    %v58 = vld [vmem:[#allocation2] sm:$0xff]
    %v59 = vld [vmem:[#allocation2 + $0x8] sm:$0xff]
    %v60 = vld [vmem:[#allocation2 + $0x10] sm:$0xff]
    %v61 = vld [vmem:[#allocation2 + $0x18] sm:$0xff]
    %v62 = vld [vmem:[#allocation2 + $0x20] sm:$0xff]
    %v63 = vld [vmem:[#allocation2 + $0x28] sm:$0xff]
    %v64 = vld [vmem:[#allocation2 + $0x30] sm:$0xff]
    %v65 = vld [vmem:[#allocation2 + $0x38] sm:$0xff]
    %v66 = vld [vmem:[#allocation2 + $0x40] sm:$0xff]
    %v67 = vld [vmem:[#allocation2 + $0x48] sm:$0xff]
    %v68 = vld [vmem:[#allocation2 + $0x50] sm:$0xff]
    %v69 = vld [vmem:[#allocation2 + $0x58] sm:$0xff]
    %v70 = vld [vmem:[#allocation2 + $0x60] sm:$0xff]
    %v71 = vld [vmem:[#allocation2 + $0x68] sm:$0xff]
    %v72 = vld [vmem:[#allocation2 + $0x70] sm:$0xff]
    %v73 = vld [vmem:[#allocation2 + $0x78] sm:$0xff]
    %v74 = vld [vmem:[#allocation2 + $0x80] sm:$0xff]
    %v75 = vld [vmem:[#allocation2 + $0x88] sm:$0xff]
    %v76 = vld [vmem:[#allocation2 + $0x90] sm:$0xff]
    %v77 = vld [vmem:[#allocation2 + $0x98] sm:$0xff]
    %v78 = vld [vmem:[#allocation2 + $0xa0] sm:$0xff]
    %v79 = vld [vmem:[#allocation2 + $0xa8] sm:$0xff]
    %v80 = vld [vmem:[#allocation2 + $0xb0] sm:$0xff]
    %v81 = vld [vmem:[#allocation2 + $0xb8] sm:$0xff]
    %v82 = vld [vmem:[#allocation2 + $0xc0] sm:$0xff]
    %v83 = vld [vmem:[#allocation2 + $0xc8] sm:$0xff]
    %v84 = vld [vmem:[#allocation2 + $0xd0] sm:$0xff]
    %v85 = vld [vmem:[#allocation2 + $0xd8] sm:$0xff]
    %v86 = vld [vmem:[#allocation2 + $0xe0] sm:$0xff]
    %v87 = vld [vmem:[#allocation2 + $0xe8] sm:$0xff]
    %v88 = vld [vmem:[#allocation2 + $0xf0] sm:$0xff]
    %v89 = vld [vmem:[#allocation2 + $0xf8] sm:$0xff]
    %v90 = vld [vmem:[#allocation2 + $0x100] sm:$0xff]
    %v91 = vld [vmem:[#allocation2 + $0x108] sm:$0xff]
    %v92 = vld [vmem:[#allocation2 + $0x110] sm:$0xff]
    %v93 = vld [vmem:[#allocation2 + $0x118] sm:$0xff]
    %v94 = vld [vmem:[#allocation2 + $0x120] sm:$0xff]
    %v95 = vld [vmem:[#allocation2 + $0x128] sm:$0xff]
    %v96 = vld [vmem:[#allocation2 + $0x130] sm:$0xff]
    %v97 = vld [vmem:[#allocation2 + $0x138] sm:$0xff]
    %v98 = vld [vmem:[#allocation2 + $0x140] sm:$0xff]
    %v99 = vld [vmem:[#allocation2 + $0x148] sm:$0xff]
    %v100 = vld [vmem:[#allocation2 + $0x150] sm:$0xff]
    %v101 = vld [vmem:[#allocation2 + $0x158] sm:$0xff]
    %v102 = vld [vmem:[#allocation2 + $0x160] sm:$0xff]
    %v103 = vld [vmem:[#allocation2 + $0x168] sm:$0xff]
    %v104 = vld [vmem:[#allocation2 + $0x170] sm:$0xff]
    %v105 = vld [vmem:[#allocation2 + $0x178] sm:$0xff]
    %v106 = vld [vmem:[#allocation2 + $0x180] sm:$0xff]
    %v107 = vld [vmem:[#allocation2 + $0x188] sm:$0xff]
    %v108 = vld [vmem:[#allocation2 + $0x190] sm:$0xff]
    %v109 = vld [vmem:[#allocation2 + $0x198] sm:$0xff]
    %v110 = vld [vmem:[#allocation2 + $0x1a0] sm:$0xff]
    %v111 = vld [vmem:[#allocation2 + $0x1a8] sm:$0xff]
    %v112 = vld [vmem:[#allocation2 + $0x1b0] sm:$0xff]
    %v113 = vld [vmem:[#allocation2 + $0x1b8] sm:$0xff]
    %v114 = vld [vmem:[#allocation2 + $0x1c0] sm:$0xff]
    %v115 = vld [vmem:[#allocation2 + $0x1c8] sm:$0xff]
    %v116 = vld [vmem:[#allocation2 + $0x1d0] sm:$0xff]
    %v117 = vld [vmem:[#allocation2 + $0x1d8] sm:$0xff]
    %v118 = vld [vmem:[#allocation2 + $0x1e0] sm:$0xff]
    %v119 = vld [vmem:[#allocation2 + $0x1e8] sm:$0xff]
    %v120 = vld [vmem:[#allocation2 + $0x1f0] sm:$0xff]
    %v121 = vld [vmem:[#allocation2 + $0x1f8] sm:$0xff]
    %v122 = vld [vmem:[#allocation2 + $0x200] sm:$0xff]
    %v123 = vld [vmem:[#allocation2 + $0x208] sm:$0xff]
    %v124 = vld [vmem:[#allocation2 + $0x210] sm:$0xff]
    %v125 = vld [vmem:[#allocation2 + $0x218] sm:$0xff]
    %v126 = vld [vmem:[#allocation2 + $0x220] sm:$0xff]
    %v127 = vld [vmem:[#allocation2 + $0x228] sm:$0xff]
    %v128 = vld [vmem:[#allocation2 + $0x230] sm:$0xff]
    %v129 = vld [vmem:[#allocation2 + $0x238] sm:$0xff]
    %v130 = vld [vmem:[#allocation2 + $0x240] sm:$0xff]
    %v131 = vld [vmem:[#allocation2 + $0x248] sm:$0xff]
    %v132 = vld [vmem:[#allocation2 + $0x250] sm:$0xff]
    %v133 = vld [vmem:[#allocation2 + $0x258] sm:$0xff]
    %v134 = vld [vmem:[#allocation2 + $0x260] sm:$0xff]
    %v135 = vld [vmem:[#allocation2 + $0x268] sm:$0xff]
    %v136 = vld [vmem:[#allocation2 + $0x270] sm:$0xff]
    %v137 = vld [vmem:[#allocation2 + $0x278] sm:$0xff]
    %v138 = vld [vmem:[#allocation2 + $0x280] sm:$0xff]
    %v139 = vld [vmem:[#allocation2 + $0x288] sm:$0xff]
    %v140 = vld [vmem:[#allocation2 + $0x290] sm:$0xff]
    %v141 = vld [vmem:[#allocation2 + $0x298] sm:$0xff]
    %v142 = vld [vmem:[#allocation2 + $0x2a0] sm:$0xff]
    %v143 = vld [vmem:[#allocation2 + $0x2a8] sm:$0xff]
    %v144 = vld [vmem:[#allocation2 + $0x2b0] sm:$0xff]
    %v145 = vld [vmem:[#allocation2 + $0x2b8] sm:$0xff]
    %v146 = vld [vmem:[#allocation2 + $0x2c0] sm:$0xff]
    %v147 = vld [vmem:[#allocation2 + $0x2c8] sm:$0xff]
    %v148 = vld [vmem:[#allocation2 + $0x2d0] sm:$0xff]
    %v149 = vld [vmem:[#allocation2 + $0x2d8] sm:$0xff]
    %v150 = vld [vmem:[#allocation2 + $0x2e0] sm:$0xff]
    %v151 = vld [vmem:[#allocation2 + $0x2e8] sm:$0xff]
    %v152 = vld [vmem:[#allocation2 + $0x2f0] sm:$0xff]
    %v153 = vld [vmem:[#allocation2 + $0x2f8] sm:$0xff]
    %v154 = vld [vmem:[#allocation2 + $0x300] sm:$0xff]
    %v155 = vld [vmem:[#allocation2 + $0x308] sm:$0xff]
    %v156 = vld [vmem:[#allocation2 + $0x310] sm:$0xff]
    %v157 = vld [vmem:[#allocation2 + $0x318] sm:$0xff]
    %v158 = vld [vmem:[#allocation2 + $0x320] sm:$0xff]
    %v159 = vld [vmem:[#allocation2 + $0x328] sm:$0xff]
    %v160 = vld [vmem:[#allocation2 + $0x330] sm:$0xff]
    %v161 = vld [vmem:[#allocation2 + $0x338] sm:$0xff]
    %v162 = vld [vmem:[#allocation2 + $0x340] sm:$0xff]
    %v163 = vld [vmem:[#allocation2 + $0x348] sm:$0xff]
    %v164 = vld [vmem:[#allocation2 + $0x350] sm:$0xff]
    %v165 = vld [vmem:[#allocation2 + $0x358] sm:$0xff]
    %v166 = vld [vmem:[#allocation2 + $0x360] sm:$0xff]
    %v167 = vld [vmem:[#allocation2 + $0x368] sm:$0xff]
    %v168 = vld [vmem:[#allocation2 + $0x370] sm:$0xff]
    %v169 = vld [vmem:[#allocation2 + $0x378] sm:$0xff]
    %v170 = vld [vmem:[#allocation2 + $0x380] sm:$0xff]
    %v171 = vld [vmem:[#allocation2 + $0x388] sm:$0xff]
    %v172 = vld [vmem:[#allocation2 + $0x390] sm:$0xff]
    %v173 = vld [vmem:[#allocation2 + $0x398] sm:$0xff]
    %v174 = vld [vmem:[#allocation2 + $0x3a0] sm:$0xff]
    %v175 = vld [vmem:[#allocation2 + $0x3a8] sm:$0xff]
    %v176 = vld [vmem:[#allocation2 + $0x3b0] sm:$0xff]
    %v177 = vld [vmem:[#allocation2 + $0x3b8] sm:$0xff]
    %v178 = vld [vmem:[#allocation2 + $0x3c0] sm:$0xff]
    %v179 = vld [vmem:[#allocation2 + $0x3c8] sm:$0xff]
    %v180 = vld [vmem:[#allocation2 + $0x3d0] sm:$0xff]
    %v181 = vld [vmem:[#allocation2 + $0x3d8] sm:$0xff]
    %v182 = vld [vmem:[#allocation2 + $0x3e0] sm:$0xff]
    %v183 = vld [vmem:[#allocation2 + $0x3e8] sm:$0xff]
    %v184 = vld [vmem:[#allocation2 + $0x3f0] sm:$0xff]
    %v185 = vld [vmem:[#allocation2 + $0x3f8] sm:$0xff]
    %v186 = vld [vmem:[#allocation2 + $0x400] sm:$0xff]
    %v187 = vld [vmem:[#allocation2 + $0x408] sm:$0xff]
    %v188 = vld [vmem:[#allocation2 + $0x410] sm:$0xff]
    %v189 = vld [vmem:[#allocation2 + $0x418] sm:$0xff]
    %v190 = vld [vmem:[#allocation2 + $0x420] sm:$0xff]
    %v191 = vld [vmem:[#allocation2 + $0x428] sm:$0xff]
    %v192 = vld [vmem:[#allocation2 + $0x430] sm:$0xff]
    %v193 = vld [vmem:[#allocation2 + $0x438] sm:$0xff]
    %v194 = vld [vmem:[#allocation2 + $0x440] sm:$0xff]
    %v195 = vld [vmem:[#allocation2 + $0x448] sm:$0xff]
    %v196 = vld [vmem:[#allocation2 + $0x450] sm:$0xff]
    %v197 = vld [vmem:[#allocation2 + $0x458] sm:$0xff]
    %v198 = vld [vmem:[#allocation2 + $0x460] sm:$0xff]
    %v199 = vld [vmem:[#allocation2 + $0x468] sm:$0xff]
    %v200 = vld [vmem:[#allocation2 + $0x470] sm:$0xff]
    %v201 = vld [vmem:[#allocation2 + $0x478] sm:$0xff]
    %v202 = vld [vmem:[#allocation2 + $0x480] sm:$0xff]
    %v203 = vld [vmem:[#allocation2 + $0x488] sm:$0xff]
    %v204 = vld [vmem:[#allocation2 + $0x490] sm:$0xff]
    %v205 = vld [vmem:[#allocation2 + $0x498] sm:$0xff]
    %v206 = vld [vmem:[#allocation2 + $0x4a0] sm:$0xff]
    %v207 = vld [vmem:[#allocation2 + $0x4a8] sm:$0xff]
    %v208 = vld [vmem:[#allocation2 + $0x4b0] sm:$0xff]
    %v209 = vld [vmem:[#allocation2 + $0x4b8] sm:$0xff]
    %v210 = vld [vmem:[#allocation2 + $0x4c0] sm:$0xff]
    %v211 = vld [vmem:[#allocation2 + $0x4c8] sm:$0xff]
    %v212 = vld [vmem:[#allocation2 + $0x4d0] sm:$0xff]
    %v213 = vld [vmem:[#allocation2 + $0x4d8] sm:$0xff]
    %v214 = vld [vmem:[#allocation2 + $0x4e0] sm:$0xff]
    %v215 = vld [vmem:[#allocation2 + $0x4e8] sm:$0xff]
    %v216 = vld [vmem:[#allocation2 + $0x4f0] sm:$0xff]
    %v217 = vld [vmem:[#allocation2 + $0x4f8] sm:$0xff]
    %v218 = vld [vmem:[#allocation2 + $0x500] sm:$0xff]
    %v219 = vld [vmem:[#allocation2 + $0x508] sm:$0xff]
    %v220 = vld [vmem:[#allocation2 + $0x510] sm:$0xff]
    %v221 = vld [vmem:[#allocation2 + $0x518] sm:$0xff]
    %v222 = vld [vmem:[#allocation2 + $0x520] sm:$0xff]
    %v223 = vld [vmem:[#allocation2 + $0x528] sm:$0xff]
    %v224 = vld [vmem:[#allocation2 + $0x530] sm:$0xff]
    %v225 = vld [vmem:[#allocation2 + $0x538] sm:$0xff]
    %v226 = vld [vmem:[#allocation2 + $0x540] sm:$0xff]
    %v227 = vld [vmem:[#allocation2 + $0x548] sm:$0xff]
    %v228 = vld [vmem:[#allocation2 + $0x550] sm:$0xff]
    %v229 = vld [vmem:[#allocation2 + $0x558] sm:$0xff]
    %v230 = vld [vmem:[#allocation2 + $0x560] sm:$0xff]
    %v231 = vld [vmem:[#allocation2 + $0x568] sm:$0xff]
    %v232 = vld [vmem:[#allocation2 + $0x570] sm:$0xff]
    %v233 = vld [vmem:[#allocation2 + $0x578] sm:$0xff]
    %v234 = vld [vmem:[#allocation2 + $0x580] sm:$0xff]
    %v235 = vld [vmem:[#allocation2 + $0x588] sm:$0xff]
    %v236 = vld [vmem:[#allocation2 + $0x590] sm:$0xff]
    %v237 = vld [vmem:[#allocation2 + $0x598] sm:$0xff]
    %v238 = vld [vmem:[#allocation2 + $0x5a0] sm:$0xff]
    %v239 = vld [vmem:[#allocation2 + $0x5a8] sm:$0xff]
    %v240 = vld [vmem:[#allocation2 + $0x5b0] sm:$0xff]
    %v241 = vld [vmem:[#allocation2 + $0x5b8] sm:$0xff]
    %v242 = vld [vmem:[#allocation2 + $0x5c0] sm:$0xff]
    %v243 = vld [vmem:[#allocation2 + $0x5c8] sm:$0xff]
    %v244 = vld [vmem:[#allocation2 + $0x5d0] sm:$0xff]
    %v245 = vld [vmem:[#allocation2 + $0x5d8] sm:$0xff]
    %v246 = vld [vmem:[#allocation2 + $0x5e0] sm:$0xff]
    %v247 = vld [vmem:[#allocation2 + $0x5e8] sm:$0xff]
    %v248 = vld [vmem:[#allocation2 + $0x5f0] sm:$0xff]
    %v249 = vld [vmem:[#allocation2 + $0x5f8] sm:$0xff]
    %v250 = vld [vmem:[#allocation2 + $0x600] sm:$0xff]
    %v251 = vld [vmem:[#allocation2 + $0x608] sm:$0xff]
    %v252 = vld [vmem:[#allocation2 + $0x610] sm:$0xff]
    %v253 = vld [vmem:[#allocation2 + $0x618] sm:$0xff]
    %v254 = vld [vmem:[%s2] sm:$0xf]
    %v256 = vperm.slane %v254, 0
    %v257 = vperm.slane %v254, 1
    %v258 = vperm.slane %v254, 2
    %v259 = vperm.slane %v254, 3
    %v460 = vunpack.c.l.b16 %v58
    %v461 = vunpack.c.h.b16 %v58
    %v462 = vunpack.c.l.b16 %v59
    %v463 = vunpack.c.h.b16 %v59
    %v464 = vunpack.c.l.b16 %v60
    %v465 = vunpack.c.h.b16 %v60
    %v466 = vunpack.c.l.b16 %v61
    %v467 = vunpack.c.h.b16 %v61
    %v468 = vunpack.c.l.b16 %v62
    %v469 = vunpack.c.h.b16 %v62
    %v470 = vunpack.c.l.b16 %v63
    %v471 = vunpack.c.h.b16 %v63
    %v472 = vunpack.c.l.b16 %v64
    %v473 = vunpack.c.h.b16 %v64
    %v474 = vunpack.c.l.b16 %v65
    %v475 = vunpack.c.h.b16 %v65
    %v476 = vunpack.c.l.b16 %v66
    %v477 = vunpack.c.h.b16 %v66
    %v478 = vunpack.c.l.b16 %v67
    %v479 = vunpack.c.h.b16 %v67
    %v480 = vunpack.c.l.b16 %v68
    %v481 = vunpack.c.h.b16 %v68
    %v482 = vunpack.c.l.b16 %v69
    %v483 = vunpack.c.h.b16 %v69
    %v484 = vunpack.c.l.b16 %v70
    %v485 = vunpack.c.h.b16 %v70
    %v486 = vunpack.c.l.b16 %v71
    %v487 = vunpack.c.h.b16 %v71
    %v488 = vunpack.c.l.b16 %v72
    %v489 = vunpack.c.h.b16 %v72
    %v490 = vunpack.c.l.b16 %v73
    %v491 = vunpack.c.h.b16 %v73
    %v492 = vunpack.c.l.b16 %v74
    %v493 = vunpack.c.h.b16 %v74
    %v494 = vunpack.c.l.b16 %v75
    %v495 = vunpack.c.h.b16 %v75
    %v496 = vunpack.c.l.b16 %v76
    %v497 = vunpack.c.h.b16 %v76
    %v498 = vunpack.c.l.b16 %v77
    %v499 = vunpack.c.h.b16 %v77
    %v500 = vunpack.c.l.b16 %v78
    %v501 = vunpack.c.h.b16 %v78
    %v502 = vunpack.c.l.b16 %v79
    %v503 = vunpack.c.h.b16 %v79
    %v504 = vunpack.c.l.b16 %v80
    %v505 = vunpack.c.h.b16 %v80
    %v506 = vunpack.c.l.b16 %v81
    %v507 = vunpack.c.h.b16 %v81
    %v508 = vunpack.c.l.b16 %v82
    %v509 = vunpack.c.h.b16 %v82
    %v510 = vunpack.c.l.b16 %v83
    %v511 = vunpack.c.h.b16 %v83
    %v512 = vunpack.c.l.b16 %v84
    %v513 = vunpack.c.h.b16 %v84
    %v514 = vunpack.c.l.b16 %v85
    %v515 = vunpack.c.h.b16 %v85
    %v516 = vunpack.c.l.b16 %v86
    %v517 = vunpack.c.h.b16 %v86
    %v518 = vunpack.c.l.b16 %v87
    %v519 = vunpack.c.h.b16 %v87
    %v520 = vunpack.c.l.b16 %v88
    %v521 = vunpack.c.h.b16 %v88
    %v522 = vunpack.c.l.b16 %v89
    %v523 = vunpack.c.h.b16 %v89
    %v524 = vunpack.c.l.b16 %v90
    %v525 = vunpack.c.h.b16 %v90
    %v526 = vunpack.c.l.b16 %v91
    %v527 = vunpack.c.h.b16 %v91
    %v528 = vunpack.c.l.b16 %v92
    %v529 = vunpack.c.h.b16 %v92
    %v530 = vunpack.c.l.b16 %v93
    %v531 = vunpack.c.h.b16 %v93
    %v532 = vunpack.c.l.b16 %v94
    %v533 = vunpack.c.h.b16 %v94
    %v534 = vunpack.c.l.b16 %v95
    %v535 = vunpack.c.h.b16 %v95
    %v536 = vunpack.c.l.b16 %v96
    %v537 = vunpack.c.h.b16 %v96
    %v538 = vunpack.c.l.b16 %v97
    %v539 = vunpack.c.h.b16 %v97
    %v540 = vunpack.c.l.b16 %v98
    %v541 = vunpack.c.h.b16 %v98
    %v542 = vunpack.c.l.b16 %v99
    %v543 = vunpack.c.h.b16 %v99
    %v544 = vunpack.c.l.b16 %v100
    %v545 = vunpack.c.h.b16 %v100
    %v546 = vunpack.c.l.b16 %v101
    %v547 = vunpack.c.h.b16 %v101
    %v548 = vunpack.c.l.b16 %v102
    %v549 = vunpack.c.h.b16 %v102
    %v550 = vunpack.c.l.b16 %v103
    %v551 = vunpack.c.h.b16 %v103
    %v552 = vunpack.c.l.b16 %v104
    %v553 = vunpack.c.h.b16 %v104
    %v554 = vunpack.c.l.b16 %v105
    %v555 = vunpack.c.h.b16 %v105
    %v556 = vunpack.c.l.b16 %v106
    %v557 = vunpack.c.h.b16 %v106
    %v558 = vunpack.c.l.b16 %v107
    %v559 = vunpack.c.h.b16 %v107
    %v560 = vunpack.c.l.b16 %v108
    %v561 = vunpack.c.h.b16 %v108
    %v562 = vunpack.c.l.b16 %v109
    %v563 = vunpack.c.h.b16 %v109
    %v564 = vunpack.c.l.b16 %v110
    %v565 = vunpack.c.h.b16 %v110
    %v566 = vunpack.c.l.b16 %v111
    %v567 = vunpack.c.h.b16 %v111
    %v568 = vunpack.c.l.b16 %v112
    %v569 = vunpack.c.h.b16 %v112
    %v570 = vunpack.c.l.b16 %v113
    %v571 = vunpack.c.h.b16 %v113
    %v572 = vunpack.c.l.b16 %v114
    %v573 = vunpack.c.h.b16 %v114
    %v574 = vunpack.c.l.b16 %v115
    %v575 = vunpack.c.h.b16 %v115
    %v576 = vunpack.c.l.b16 %v116
    %v577 = vunpack.c.h.b16 %v116
    %v578 = vunpack.c.l.b16 %v117
    %v579 = vunpack.c.h.b16 %v117
    %v580 = vunpack.c.l.b16 %v118
    %v581 = vunpack.c.h.b16 %v118
    %v582 = vunpack.c.l.b16 %v119
    %v583 = vunpack.c.h.b16 %v119
    %v584 = vunpack.c.l.b16 %v120
    %v585 = vunpack.c.h.b16 %v120
    %v586 = vunpack.c.l.b16 %v121
    %v587 = vunpack.c.h.b16 %v121
    %v588 = vunpack.c.l.b16 %v122
    %v589 = vunpack.c.h.b16 %v122
    %v590 = vunpack.c.l.b16 %v123
    %v591 = vunpack.c.h.b16 %v123
    %v592 = vunpack.c.l.b16 %v124
    %v593 = vunpack.c.h.b16 %v124
    %v594 = vunpack.c.l.b16 %v125
    %v595 = vunpack.c.h.b16 %v125
    %v596 = vunpack.c.l.b16 %v126
    %v597 = vunpack.c.h.b16 %v126
    %v598 = vunpack.c.l.b16 %v127
    %v599 = vunpack.c.h.b16 %v127
    %v600 = vunpack.c.l.b16 %v128
    %v601 = vunpack.c.h.b16 %v128
    %v602 = vunpack.c.l.b16 %v129
    %v603 = vunpack.c.h.b16 %v129
    %v604 = vunpack.c.l.b16 %v130
    %v605 = vunpack.c.h.b16 %v130
    %v606 = vunpack.c.l.b16 %v131
    %v607 = vunpack.c.h.b16 %v131
    %v608 = vunpack.c.l.b16 %v132
    %v609 = vunpack.c.h.b16 %v132
    %v610 = vunpack.c.l.b16 %v133
    %v611 = vunpack.c.h.b16 %v133
    %v612 = vunpack.c.l.b16 %v134
    %v613 = vunpack.c.h.b16 %v134
    %v614 = vunpack.c.l.b16 %v135
    %v615 = vunpack.c.h.b16 %v135
    %v616 = vunpack.c.l.b16 %v136
    %v617 = vunpack.c.h.b16 %v136
    %v618 = vunpack.c.l.b16 %v137
    %v619 = vunpack.c.h.b16 %v137
    %v620 = vunpack.c.l.b16 %v138
    %v621 = vunpack.c.h.b16 %v138
    %v622 = vunpack.c.l.b16 %v139
    %v623 = vunpack.c.h.b16 %v139
    %v624 = vunpack.c.l.b16 %v140
    %v625 = vunpack.c.h.b16 %v140
    %v626 = vunpack.c.l.b16 %v141
    %v627 = vunpack.c.h.b16 %v141
    %v628 = vunpack.c.l.b16 %v142
    %v629 = vunpack.c.h.b16 %v142
    %v630 = vunpack.c.l.b16 %v143
    %v631 = vunpack.c.h.b16 %v143
    %v632 = vunpack.c.l.b16 %v144
    %v633 = vunpack.c.h.b16 %v144
    %v634 = vunpack.c.l.b16 %v145
    %v635 = vunpack.c.h.b16 %v145
    %v636 = vunpack.c.l.b16 %v146
    %v637 = vunpack.c.h.b16 %v146
    %v638 = vunpack.c.l.b16 %v147
    %v639 = vunpack.c.h.b16 %v147
    %v640 = vunpack.c.l.b16 %v148
    %v641 = vunpack.c.h.b16 %v148
    %v642 = vunpack.c.l.b16 %v149
    %v643 = vunpack.c.h.b16 %v149
    %v644 = vunpack.c.l.b16 %v150
    %v645 = vunpack.c.h.b16 %v150
    %v646 = vunpack.c.l.b16 %v151
    %v647 = vunpack.c.h.b16 %v151
    %v648 = vunpack.c.l.b16 %v152
    %v649 = vunpack.c.h.b16 %v152
    %v650 = vunpack.c.l.b16 %v153
    %v651 = vunpack.c.h.b16 %v153
    %v652 = vunpack.c.l.b16 %v154
    %v653 = vunpack.c.h.b16 %v154
    %v654 = vunpack.c.l.b16 %v155
    %v655 = vunpack.c.h.b16 %v155
    %v656 = vunpack.c.l.b16 %v156
    %v657 = vunpack.c.h.b16 %v156
    %v658 = vunpack.c.l.b16 %v157
    %v659 = vunpack.c.h.b16 %v157
    %v660 = vunpack.c.l.b16 %v158
    %v661 = vunpack.c.h.b16 %v158
    %v662 = vunpack.c.l.b16 %v159
    %v663 = vunpack.c.h.b16 %v159
    %v664 = vunpack.c.l.b16 %v160
    %v665 = vunpack.c.h.b16 %v160
    %v666 = vunpack.c.l.b16 %v161
    %v667 = vunpack.c.h.b16 %v161
    %v668 = vunpack.c.l.b16 %v162
    %v669 = vunpack.c.h.b16 %v162
    %v670 = vunpack.c.l.b16 %v163
    %v671 = vunpack.c.h.b16 %v163
    %v672 = vunpack.c.l.b16 %v164
    %v673 = vunpack.c.h.b16 %v164
    %v674 = vunpack.c.l.b16 %v165
    %v675 = vunpack.c.h.b16 %v165
    %v676 = vunpack.c.l.b16 %v166
    %v677 = vunpack.c.h.b16 %v166
    %v678 = vunpack.c.l.b16 %v167
    %v679 = vunpack.c.h.b16 %v167
    %v680 = vunpack.c.l.b16 %v168
    %v681 = vunpack.c.h.b16 %v168
    %v682 = vunpack.c.l.b16 %v169
    %v683 = vunpack.c.h.b16 %v169
    %v684 = vunpack.c.l.b16 %v170
    %v685 = vunpack.c.h.b16 %v170
    %v686 = vunpack.c.l.b16 %v171
    %v687 = vunpack.c.h.b16 %v171
    %v688 = vunpack.c.l.b16 %v172
    %v689 = vunpack.c.h.b16 %v172
    %v690 = vunpack.c.l.b16 %v173
    %v691 = vunpack.c.h.b16 %v173
    %v692 = vunpack.c.l.b16 %v174
    %v693 = vunpack.c.h.b16 %v174
    %v694 = vunpack.c.l.b16 %v175
    %v695 = vunpack.c.h.b16 %v175
    %v696 = vunpack.c.l.b16 %v176
    %v697 = vunpack.c.h.b16 %v176
    %v698 = vunpack.c.l.b16 %v177
    %v699 = vunpack.c.h.b16 %v177
    %v700 = vunpack.c.l.b16 %v178
    %v701 = vunpack.c.h.b16 %v178
    %v702 = vunpack.c.l.b16 %v179
    %v703 = vunpack.c.h.b16 %v179
    %v704 = vunpack.c.l.b16 %v180
    %v705 = vunpack.c.h.b16 %v180
    %v706 = vunpack.c.l.b16 %v181
    %v707 = vunpack.c.h.b16 %v181
    %v708 = vunpack.c.l.b16 %v182
    %v709 = vunpack.c.h.b16 %v182
    %v710 = vunpack.c.l.b16 %v183
    %v711 = vunpack.c.h.b16 %v183
    %v712 = vunpack.c.l.b16 %v184
    %v713 = vunpack.c.h.b16 %v184
    %v714 = vunpack.c.l.b16 %v185
    %v715 = vunpack.c.h.b16 %v185
    %v716 = vunpack.c.l.b16 %v186
    %v717 = vunpack.c.h.b16 %v186
    %v718 = vunpack.c.l.b16 %v187
    %v719 = vunpack.c.h.b16 %v187
    %v720 = vunpack.c.l.b16 %v188
    %v721 = vunpack.c.h.b16 %v188
    %v722 = vunpack.c.l.b16 %v189
    %v723 = vunpack.c.h.b16 %v189
    %v724 = vunpack.c.l.b16 %v190
    %v725 = vunpack.c.h.b16 %v190
    %v726 = vunpack.c.l.b16 %v191
    %v727 = vunpack.c.h.b16 %v191
    %v728 = vunpack.c.l.b16 %v192
    %v729 = vunpack.c.h.b16 %v192
    %v730 = vunpack.c.l.b16 %v193
    %v731 = vunpack.c.h.b16 %v193
    %v732 = vunpack.c.l.b16 %v194
    %v733 = vunpack.c.h.b16 %v194
    %v734 = vunpack.c.l.b16 %v195
    %v735 = vunpack.c.h.b16 %v195
    %v736 = vunpack.c.l.b16 %v196
    %v737 = vunpack.c.h.b16 %v196
    %v738 = vunpack.c.l.b16 %v197
    %v739 = vunpack.c.h.b16 %v197
    %v740 = vunpack.c.l.b16 %v198
    %v741 = vunpack.c.h.b16 %v198
    %v742 = vunpack.c.l.b16 %v199
    %v743 = vunpack.c.h.b16 %v199
    %v744 = vunpack.c.l.b16 %v200
    %v745 = vunpack.c.h.b16 %v200
    %v746 = vunpack.c.l.b16 %v201
    %v747 = vunpack.c.h.b16 %v201
    %v748 = vunpack.c.l.b16 %v202
    %v749 = vunpack.c.h.b16 %v202
    %v750 = vunpack.c.l.b16 %v203
    %v751 = vunpack.c.h.b16 %v203
    %v752 = vunpack.c.l.b16 %v204
    %v753 = vunpack.c.h.b16 %v204
    %v754 = vunpack.c.l.b16 %v205
    %v755 = vunpack.c.h.b16 %v205
    %v756 = vunpack.c.l.b16 %v206
    %v757 = vunpack.c.h.b16 %v206
    %v758 = vunpack.c.l.b16 %v207
    %v759 = vunpack.c.h.b16 %v207
    %v760 = vunpack.c.l.b16 %v208
    %v761 = vunpack.c.h.b16 %v208
    %v762 = vunpack.c.l.b16 %v209
    %v763 = vunpack.c.h.b16 %v209
    %v764 = vunpack.c.l.b16 %v210
    %v765 = vunpack.c.h.b16 %v210
    %v766 = vunpack.c.l.b16 %v211
    %v767 = vunpack.c.h.b16 %v211
    %v768 = vunpack.c.l.b16 %v212
    %v769 = vunpack.c.h.b16 %v212
    %v770 = vunpack.c.l.b16 %v213
    %v771 = vunpack.c.h.b16 %v213
    %v772 = vunpack.c.l.b16 %v214
    %v773 = vunpack.c.h.b16 %v214
    %v774 = vunpack.c.l.b16 %v215
    %v775 = vunpack.c.h.b16 %v215
    %v776 = vunpack.c.l.b16 %v216
    %v777 = vunpack.c.h.b16 %v216
    %v778 = vunpack.c.l.b16 %v217
    %v779 = vunpack.c.h.b16 %v217
    %v780 = vunpack.c.l.b16 %v218
    %v781 = vunpack.c.h.b16 %v218
    %v782 = vunpack.c.l.b16 %v219
    %v783 = vunpack.c.h.b16 %v219
    %v784 = vunpack.c.l.b16 %v220
    %v785 = vunpack.c.h.b16 %v220
    %v786 = vunpack.c.l.b16 %v221
    %v787 = vunpack.c.h.b16 %v221
    %v788 = vunpack.c.l.b16 %v222
    %v789 = vunpack.c.h.b16 %v222
    %v790 = vunpack.c.l.b16 %v223
    %v791 = vunpack.c.h.b16 %v223
    %v792 = vunpack.c.l.b16 %v224
    %v793 = vunpack.c.h.b16 %v224
    %v794 = vunpack.c.l.b16 %v225
    %v795 = vunpack.c.h.b16 %v225
    %v796 = vunpack.c.l.b16 %v226
    %v797 = vunpack.c.h.b16 %v226
    %v798 = vunpack.c.l.b16 %v227
    %v799 = vunpack.c.h.b16 %v227
    %v800 = vunpack.c.l.b16 %v228
    %v801 = vunpack.c.h.b16 %v228
    %v802 = vunpack.c.l.b16 %v229
    %v803 = vunpack.c.h.b16 %v229
    %v804 = vunpack.c.l.b16 %v230
    %v805 = vunpack.c.h.b16 %v230
    %v806 = vunpack.c.l.b16 %v231
    %v807 = vunpack.c.h.b16 %v231
    %v808 = vunpack.c.l.b16 %v232
    %v809 = vunpack.c.h.b16 %v232
    %v810 = vunpack.c.l.b16 %v233
    %v811 = vunpack.c.h.b16 %v233
    %v812 = vunpack.c.l.b16 %v234
    %v813 = vunpack.c.h.b16 %v234
    %v814 = vunpack.c.l.b16 %v235
    %v815 = vunpack.c.h.b16 %v235
    %v816 = vunpack.c.l.b16 %v236
    %v817 = vunpack.c.h.b16 %v236
    %v818 = vunpack.c.l.b16 %v237
    %v819 = vunpack.c.h.b16 %v237
    %v820 = vunpack.c.l.b16 %v238
    %v821 = vunpack.c.h.b16 %v238
    %v822 = vunpack.c.l.b16 %v239
    %v823 = vunpack.c.h.b16 %v239
    %v824 = vunpack.c.l.b16 %v240
    %v825 = vunpack.c.h.b16 %v240
    %v826 = vunpack.c.l.b16 %v241
    %v827 = vunpack.c.h.b16 %v241
    %v828 = vunpack.c.l.b16 %v242
    %v829 = vunpack.c.h.b16 %v242
    %v830 = vunpack.c.l.b16 %v243
    %v831 = vunpack.c.h.b16 %v243
    %v832 = vunpack.c.l.b16 %v244
    %v833 = vunpack.c.h.b16 %v244
    %v834 = vunpack.c.l.b16 %v245
    %v835 = vunpack.c.h.b16 %v245
    %v836 = vunpack.c.l.b16 %v246
    %v837 = vunpack.c.h.b16 %v246
    %v838 = vunpack.c.l.b16 %v247
    %v839 = vunpack.c.h.b16 %v247
    %v840 = vunpack.c.l.b16 %v248
    %v841 = vunpack.c.h.b16 %v248
    %v842 = vunpack.c.l.b16 %v249
    %v843 = vunpack.c.h.b16 %v249
    %v844 = vunpack.c.l.b16 %v250
    %v845 = vunpack.c.h.b16 %v250
    %v846 = vunpack.c.l.b16 %v251
    %v847 = vunpack.c.h.b16 %v251
    %v848 = vunpack.c.l.b16 %v252
    %v849 = vunpack.c.h.b16 %v252
    %v850 = vunpack.c.l.b16 %v253
    %v851 = vunpack.c.h.b16 %v253
    %v852 = vpack.c.b16 %v464, %v460
    %v853 = vpack.c.b16 %v465, %v461
    %v854 = vpack.c.b16 %v466, %v462
    %v855 = vpack.c.b16 %v467, %v463
    %v856 = vpack.c.b16 %v472, %v468
    %v857 = vpack.c.b16 %v473, %v469
    %v858 = vpack.c.b16 %v474, %v470
    %v859 = vpack.c.b16 %v475, %v471
    %v860 = vpack.c.b16 %v480, %v476
    %v861 = vpack.c.b16 %v481, %v477
    %v862 = vpack.c.b16 %v482, %v478
    %v863 = vpack.c.b16 %v483, %v479
    %v864 = vpack.c.b16 %v488, %v484
    %v865 = vpack.c.b16 %v489, %v485
    %v866 = vpack.c.b16 %v490, %v486
    %v867 = vpack.c.b16 %v491, %v487
    %v868 = vpack.c.b16 %v496, %v492
    %v869 = vpack.c.b16 %v497, %v493
    %v870 = vpack.c.b16 %v498, %v494
    %v871 = vpack.c.b16 %v499, %v495
    %v872 = vpack.c.b16 %v504, %v500
    %v873 = vpack.c.b16 %v505, %v501
    %v874 = vpack.c.b16 %v506, %v502
    %v875 = vpack.c.b16 %v507, %v503
    %v876 = vpack.c.b16 %v512, %v508
    %v877 = vpack.c.b16 %v513, %v509
    %v878 = vpack.c.b16 %v514, %v510
    %v879 = vpack.c.b16 %v515, %v511
    %v880 = vpack.c.b16 %v520, %v516
    %v881 = vpack.c.b16 %v521, %v517
    %v882 = vpack.c.b16 %v522, %v518
    %v883 = vpack.c.b16 %v523, %v519
    %v884 = vpack.c.b16 %v528, %v524
    %v885 = vpack.c.b16 %v529, %v525
    %v886 = vpack.c.b16 %v530, %v526
    %v887 = vpack.c.b16 %v531, %v527
    %v888 = vpack.c.b16 %v536, %v532
    %v889 = vpack.c.b16 %v537, %v533
    %v890 = vpack.c.b16 %v538, %v534
    %v891 = vpack.c.b16 %v539, %v535
    %v892 = vpack.c.b16 %v544, %v540
    %v893 = vpack.c.b16 %v545, %v541
    %v894 = vpack.c.b16 %v546, %v542
    %v895 = vpack.c.b16 %v547, %v543
    %v896 = vpack.c.b16 %v552, %v548
    %v897 = vpack.c.b16 %v553, %v549
    %v898 = vpack.c.b16 %v554, %v550
    %v899 = vpack.c.b16 %v555, %v551
    %v900 = vpack.c.b16 %v560, %v556
    %v901 = vpack.c.b16 %v561, %v557
    %v902 = vpack.c.b16 %v562, %v558
    %v903 = vpack.c.b16 %v563, %v559
    %v904 = vpack.c.b16 %v568, %v564
    %v905 = vpack.c.b16 %v569, %v565
    %v906 = vpack.c.b16 %v570, %v566
    %v907 = vpack.c.b16 %v571, %v567
    %v908 = vpack.c.b16 %v576, %v572
    %v909 = vpack.c.b16 %v577, %v573
    %v910 = vpack.c.b16 %v578, %v574
    %v911 = vpack.c.b16 %v579, %v575
    %v912 = vpack.c.b16 %v584, %v580
    %v913 = vpack.c.b16 %v585, %v581
    %v914 = vpack.c.b16 %v586, %v582
    %v915 = vpack.c.b16 %v587, %v583
    %v916 = vpack.c.b16 %v592, %v588
    %v917 = vpack.c.b16 %v593, %v589
    %v918 = vpack.c.b16 %v594, %v590
    %v919 = vpack.c.b16 %v595, %v591
    %v920 = vpack.c.b16 %v600, %v596
    %v921 = vpack.c.b16 %v601, %v597
    %v922 = vpack.c.b16 %v602, %v598
    %v923 = vpack.c.b16 %v603, %v599
    %v924 = vpack.c.b16 %v608, %v604
    %v925 = vpack.c.b16 %v609, %v605
    %v926 = vpack.c.b16 %v610, %v606
    %v927 = vpack.c.b16 %v611, %v607
    %v928 = vpack.c.b16 %v616, %v612
    %v929 = vpack.c.b16 %v617, %v613
    %v930 = vpack.c.b16 %v618, %v614
    %v931 = vpack.c.b16 %v619, %v615
    %v932 = vpack.c.b16 %v624, %v620
    %v933 = vpack.c.b16 %v625, %v621
    %v934 = vpack.c.b16 %v626, %v622
    %v935 = vpack.c.b16 %v627, %v623
    %v936 = vpack.c.b16 %v632, %v628
    %v937 = vpack.c.b16 %v633, %v629
    %v938 = vpack.c.b16 %v634, %v630
    %v939 = vpack.c.b16 %v635, %v631
    %v940 = vpack.c.b16 %v640, %v636
    %v941 = vpack.c.b16 %v641, %v637
    %v942 = vpack.c.b16 %v642, %v638
    %v943 = vpack.c.b16 %v643, %v639
    %v944 = vpack.c.b16 %v648, %v644
    %v945 = vpack.c.b16 %v649, %v645
    %v946 = vpack.c.b16 %v650, %v646
    %v947 = vpack.c.b16 %v651, %v647
    %v948 = vpack.c.b16 %v656, %v652
    %v949 = vpack.c.b16 %v657, %v653
    %v950 = vpack.c.b16 %v658, %v654
    %v951 = vpack.c.b16 %v659, %v655
    %v952 = vpack.c.b16 %v664, %v660
    %v953 = vpack.c.b16 %v665, %v661
    %v954 = vpack.c.b16 %v666, %v662
    %v955 = vpack.c.b16 %v667, %v663
    %v956 = vpack.c.b16 %v672, %v668
    %v957 = vpack.c.b16 %v673, %v669
    %v958 = vpack.c.b16 %v674, %v670
    %v959 = vpack.c.b16 %v675, %v671
    %v960 = vpack.c.b16 %v680, %v676
    %v961 = vpack.c.b16 %v681, %v677
    %v962 = vpack.c.b16 %v682, %v678
    %v963 = vpack.c.b16 %v683, %v679
    %v964 = vpack.c.b16 %v688, %v684
    %v965 = vpack.c.b16 %v689, %v685
    %v966 = vpack.c.b16 %v690, %v686
    %v967 = vpack.c.b16 %v691, %v687
    %v968 = vpack.c.b16 %v696, %v692
    %v969 = vpack.c.b16 %v697, %v693
    %v970 = vpack.c.b16 %v698, %v694
    %v971 = vpack.c.b16 %v699, %v695
    %v972 = vpack.c.b16 %v704, %v700
    %v973 = vpack.c.b16 %v705, %v701
    %v974 = vpack.c.b16 %v706, %v702
    %v975 = vpack.c.b16 %v707, %v703
    %v976 = vpack.c.b16 %v712, %v708
    %v977 = vpack.c.b16 %v713, %v709
    %v978 = vpack.c.b16 %v714, %v710
    %v979 = vpack.c.b16 %v715, %v711
    %v980 = vpack.c.b16 %v720, %v716
    %v981 = vpack.c.b16 %v721, %v717
    %v982 = vpack.c.b16 %v722, %v718
    %v983 = vpack.c.b16 %v723, %v719
    %v984 = vpack.c.b16 %v728, %v724
    %v985 = vpack.c.b16 %v729, %v725
    %v986 = vpack.c.b16 %v730, %v726
    %v987 = vpack.c.b16 %v731, %v727
    %v988 = vpack.c.b16 %v736, %v732
    %v989 = vpack.c.b16 %v737, %v733
    %v990 = vpack.c.b16 %v738, %v734
    %v991 = vpack.c.b16 %v739, %v735
    %v992 = vpack.c.b16 %v744, %v740
    %v993 = vpack.c.b16 %v745, %v741
    %v994 = vpack.c.b16 %v746, %v742
    %v995 = vpack.c.b16 %v747, %v743
    %v996 = vpack.c.b16 %v752, %v748
    %v997 = vpack.c.b16 %v753, %v749
    %v998 = vpack.c.b16 %v754, %v750
    %v999 = vpack.c.b16 %v755, %v751
    %v1000 = vpack.c.b16 %v760, %v756
    %v1001 = vpack.c.b16 %v761, %v757
    %v1002 = vpack.c.b16 %v762, %v758
    %v1003 = vpack.c.b16 %v763, %v759
    %v1004 = vpack.c.b16 %v768, %v764
    %v1005 = vpack.c.b16 %v769, %v765
    %v1006 = vpack.c.b16 %v770, %v766
    %v1007 = vpack.c.b16 %v771, %v767
    %v1008 = vpack.c.b16 %v776, %v772
    %v1009 = vpack.c.b16 %v777, %v773
    %v1010 = vpack.c.b16 %v778, %v774
    %v1011 = vpack.c.b16 %v779, %v775
    %v1012 = vpack.c.b16 %v784, %v780
    %v1013 = vpack.c.b16 %v785, %v781
    %v1014 = vpack.c.b16 %v786, %v782
    %v1015 = vpack.c.b16 %v787, %v783
    %v1016 = vpack.c.b16 %v792, %v788
    %v1017 = vpack.c.b16 %v793, %v789
    %v1018 = vpack.c.b16 %v794, %v790
    %v1019 = vpack.c.b16 %v795, %v791
    %v1020 = vpack.c.b16 %v800, %v796
    %v1021 = vpack.c.b16 %v801, %v797
    %v1022 = vpack.c.b16 %v802, %v798
    %v1023 = vpack.c.b16 %v803, %v799
    %v1024 = vpack.c.b16 %v808, %v804
    %v1025 = vpack.c.b16 %v809, %v805
    %v1026 = vpack.c.b16 %v810, %v806
    %v1027 = vpack.c.b16 %v811, %v807
    %v1028 = vpack.c.b16 %v816, %v812
    %v1029 = vpack.c.b16 %v817, %v813
    %v1030 = vpack.c.b16 %v818, %v814
    %v1031 = vpack.c.b16 %v819, %v815
    %v1032 = vpack.c.b16 %v824, %v820
    %v1033 = vpack.c.b16 %v825, %v821
    %v1034 = vpack.c.b16 %v826, %v822
    %v1035 = vpack.c.b16 %v827, %v823
    %v1036 = vpack.c.b16 %v832, %v828
    %v1037 = vpack.c.b16 %v833, %v829
    %v1038 = vpack.c.b16 %v834, %v830
    %v1039 = vpack.c.b16 %v835, %v831
    %v1040 = vpack.c.b16 %v840, %v836
    %v1041 = vpack.c.b16 %v841, %v837
    %v1042 = vpack.c.b16 %v842, %v838
    %v1043 = vpack.c.b16 %v843, %v839
    %v1044 = vpack.c.b16 %v848, %v844
    %v1045 = vpack.c.b16 %v849, %v845
    %v1046 = vpack.c.b16 %v850, %v846
    %v1047 = vpack.c.b16 %v851, %v847
    %vm1244 = vcmask 130048
    %v1246 = vsel %vm1244, %v57, 0
    %1248 = vmatpush.bf16.msra.mxu0 %v880
    %1249 = vmatpush.bf16.msra.mxu0 %v876
    %1250 = vmatpush.bf16.msra.mxu0 %v872
    %1251 = vmatpush.bf16.msra.mxu0 %v868
    %1252 = vmatpush.bf16.msra.mxu0 %v864
    %1253 = vmatpush.bf16.msra.mxu0 %v860
    %1254 = vmatpush.bf16.msra.mxu0 %v856
    %1255 = vmatpush.bf16.msra.mxu0 %v852
    %1256 = vmatmul.bf16.gmra.mxu0 %v51
    %v1257 = vpop.f32.mrf.mxu0
    %v1258 = vadd.f32 %v256, %v1257
    %v1259 = vpop.f32.mrf.mxu0
    %1260 = vdwg.mxu0
    %1261 = vmatpush.bf16.msra.mxu0 %v912
    %1262 = vmatpush.bf16.msra.mxu0 %v908
    %1263 = vmatpush.bf16.msra.mxu0 %v904
    %1264 = vmatpush.bf16.msra.mxu0 %v900
    %1265 = vmatpush.bf16.msra.mxu0 %v896
    %1266 = vmatpush.bf16.msra.mxu0 %v892
    %1267 = vmatpush.bf16.msra.mxu0 %v888
    %1268 = vmatpush.bf16.msra.mxu0 %v884
    %1269 = vmatmul.bf16.gmra.mxu0 %v52
    %v1270 = vpop.f32.mrf.mxu0
    %v1271 = vadd.f32 %v1258, %v1270
    %v1272 = vpop.f32.mrf.mxu0
    %1273 = vdwg.mxu0
    %1274 = vmatpush.bf16.msra.mxu0 %v944
    %1275 = vmatpush.bf16.msra.mxu0 %v940
    %1276 = vmatpush.bf16.msra.mxu0 %v936
    %1277 = vmatpush.bf16.msra.mxu0 %v932
    %1278 = vmatpush.bf16.msra.mxu0 %v928
    %1279 = vmatpush.bf16.msra.mxu0 %v924
    %1280 = vmatpush.bf16.msra.mxu0 %v920
    %1281 = vmatpush.bf16.msra.mxu0 %v916
    %1282 = vmatmul.bf16.gmra.mxu0 %v53
    %v1283 = vpop.f32.mrf.mxu0
    %v1284 = vadd.f32 %v1271, %v1283
    %v1285 = vpop.f32.mrf.mxu0
    %1286 = vdwg.mxu0
    %1287 = vmatpush.bf16.msra.mxu0 %v976
    %1288 = vmatpush.bf16.msra.mxu0 %v972
    %1289 = vmatpush.bf16.msra.mxu0 %v968
    %1290 = vmatpush.bf16.msra.mxu0 %v964
    %1291 = vmatpush.bf16.msra.mxu0 %v960
    %1292 = vmatpush.bf16.msra.mxu0 %v956
    %1293 = vmatpush.bf16.msra.mxu0 %v952
    %1294 = vmatpush.bf16.msra.mxu0 %v948
    %1295 = vmatmul.bf16.gmra.mxu0 %v54
    %v1296 = vpop.f32.mrf.mxu0
    %v1297 = vadd.f32 %v1284, %v1296
    %v1298 = vpop.f32.mrf.mxu0
    %1299 = vdwg.mxu0
    %1300 = vmatpush.bf16.msra.mxu0 %v1008
    %1301 = vmatpush.bf16.msra.mxu0 %v1004
    %1302 = vmatpush.bf16.msra.mxu0 %v1000
    %1303 = vmatpush.bf16.msra.mxu0 %v996
    %1304 = vmatpush.bf16.msra.mxu0 %v992
    %1305 = vmatpush.bf16.msra.mxu0 %v988
    %1306 = vmatpush.bf16.msra.mxu0 %v984
    %1307 = vmatpush.bf16.msra.mxu0 %v980
    %1308 = vmatmul.bf16.gmra.mxu0 %v55
    %v1309 = vpop.f32.mrf.mxu0
    %v1310 = vadd.f32 %v1297, %v1309
    %v1311 = vpop.f32.mrf.mxu0
    %1312 = vdwg.mxu0
    %1313 = vmatpush.bf16.msra.mxu0 %v1040
    %1314 = vmatpush.bf16.msra.mxu0 %v1036
    %1315 = vmatpush.bf16.msra.mxu0 %v1032
    %1316 = vmatpush.bf16.msra.mxu0 %v1028
    %1317 = vmatpush.bf16.msra.mxu0 %v1024
    %1318 = vmatpush.bf16.msra.mxu0 %v1020
    %1319 = vmatpush.bf16.msra.mxu0 %v1016
    %1320 = vmatpush.bf16.msra.mxu0 %v1012
    %1321 = vmatmul.bf16.gmra.mxu0 %v56
    %v1322 = vpop.f32.mrf.mxu0
    %v1323 = vadd.f32 %v1310, %v1322
    %v1324 = vpop.f32.mrf.mxu0
    %1325 = vdwg.mxu0
    %1326 = vmatpush.bf16.msra.mxu0 0
    %1327 = vmatpush.bf16.msra.mxu0 0
    %1328 = vmatpush.bf16.msra.mxu0 0
    %1329 = vmatpush.bf16.msra.mxu0 0
    %1330 = vmatpush.bf16.msra.mxu0 0
    %1331 = vmatpush.bf16.msra.mxu0 0
    %1332 = vmatpush.bf16.msra.mxu0 0
    %1333 = vmatpush.bf16.msra.mxu0 %v1044
    %1334 = vmatmul.bf16.gmra.mxu0 %v1246
    %v1335 = vpop.f32.mrf.mxu0
    %v1336 = vadd.f32 %v1323, %v1335
    %v1337 = vpop.f32.mrf.mxu0
    %1338 = vdwg.mxu0
    %1339 = vmatpush.bf16.msra.mxu0 %v881
    %1340 = vmatpush.bf16.msra.mxu0 %v877
    %1341 = vmatpush.bf16.msra.mxu0 %v873
    %1342 = vmatpush.bf16.msra.mxu0 %v869
    %1343 = vmatpush.bf16.msra.mxu0 %v865
    %1344 = vmatpush.bf16.msra.mxu0 %v861
    %1345 = vmatpush.bf16.msra.mxu0 %v857
    %1346 = vmatpush.bf16.msra.mxu0 %v853
    %1347 = vmatmul.bf16.gmra.mxu0 %v51
    %v1348 = vpop.f32.mrf.mxu0
    %v1349 = vadd.f32 %v257, %v1348
    %v1350 = vpop.f32.mrf.mxu0
    %1351 = vdwg.mxu0
    %1352 = vmatpush.bf16.msra.mxu0 %v913
    %1353 = vmatpush.bf16.msra.mxu0 %v909
    %1354 = vmatpush.bf16.msra.mxu0 %v905
    %1355 = vmatpush.bf16.msra.mxu0 %v901
    %1356 = vmatpush.bf16.msra.mxu0 %v897
    %1357 = vmatpush.bf16.msra.mxu0 %v893
    %1358 = vmatpush.bf16.msra.mxu0 %v889
    %1359 = vmatpush.bf16.msra.mxu0 %v885
    %1360 = vmatmul.bf16.gmra.mxu0 %v52
    %v1361 = vpop.f32.mrf.mxu0
    %v1362 = vadd.f32 %v1349, %v1361
    %v1363 = vpop.f32.mrf.mxu0
    %1364 = vdwg.mxu0
    %1365 = vmatpush.bf16.msra.mxu0 %v945
    %1366 = vmatpush.bf16.msra.mxu0 %v941
    %1367 = vmatpush.bf16.msra.mxu0 %v937
    %1368 = vmatpush.bf16.msra.mxu0 %v933
    %1369 = vmatpush.bf16.msra.mxu0 %v929
    %1370 = vmatpush.bf16.msra.mxu0 %v925
    %1371 = vmatpush.bf16.msra.mxu0 %v921
    %1372 = vmatpush.bf16.msra.mxu0 %v917
    %1373 = vmatmul.bf16.gmra.mxu0 %v53
    %v1374 = vpop.f32.mrf.mxu0
    %v1375 = vadd.f32 %v1362, %v1374
    %v1376 = vpop.f32.mrf.mxu0
    %1377 = vdwg.mxu0
    %1378 = vmatpush.bf16.msra.mxu0 %v977
    %1379 = vmatpush.bf16.msra.mxu0 %v973
    %1380 = vmatpush.bf16.msra.mxu0 %v969
    %1381 = vmatpush.bf16.msra.mxu0 %v965
    %1382 = vmatpush.bf16.msra.mxu0 %v961
    %1383 = vmatpush.bf16.msra.mxu0 %v957
    %1384 = vmatpush.bf16.msra.mxu0 %v953
    %1385 = vmatpush.bf16.msra.mxu0 %v949
    %1386 = vmatmul.bf16.gmra.mxu0 %v54
    %v1387 = vpop.f32.mrf.mxu0
    %v1388 = vadd.f32 %v1375, %v1387
    %v1389 = vpop.f32.mrf.mxu0
    %1390 = vdwg.mxu0
    %1391 = vmatpush.bf16.msra.mxu0 %v1009
    %1392 = vmatpush.bf16.msra.mxu0 %v1005
    %1393 = vmatpush.bf16.msra.mxu0 %v1001
    %1394 = vmatpush.bf16.msra.mxu0 %v997
    %1395 = vmatpush.bf16.msra.mxu0 %v993
    %1396 = vmatpush.bf16.msra.mxu0 %v989
    %1397 = vmatpush.bf16.msra.mxu0 %v985
    %1398 = vmatpush.bf16.msra.mxu0 %v981
    %1399 = vmatmul.bf16.gmra.mxu0 %v55
    %v1400 = vpop.f32.mrf.mxu0
    %v1401 = vadd.f32 %v1388, %v1400
    %v1402 = vpop.f32.mrf.mxu0
    %1403 = vdwg.mxu0
    %1404 = vmatpush.bf16.msra.mxu0 %v1041
    %1405 = vmatpush.bf16.msra.mxu0 %v1037
    %1406 = vmatpush.bf16.msra.mxu0 %v1033
    %1407 = vmatpush.bf16.msra.mxu0 %v1029
    %1408 = vmatpush.bf16.msra.mxu0 %v1025
    %1409 = vmatpush.bf16.msra.mxu0 %v1021
    %1410 = vmatpush.bf16.msra.mxu0 %v1017
    %1411 = vmatpush.bf16.msra.mxu0 %v1013
    %1412 = vmatmul.bf16.gmra.mxu0 %v56
    %v1413 = vpop.f32.mrf.mxu0
    %v1414 = vadd.f32 %v1401, %v1413
    %v1415 = vpop.f32.mrf.mxu0
    %1416 = vdwg.mxu0
    %1417 = vmatpush.bf16.msra.mxu0 0
    %1418 = vmatpush.bf16.msra.mxu0 0
    %1419 = vmatpush.bf16.msra.mxu0 0
    %1420 = vmatpush.bf16.msra.mxu0 0
    %1421 = vmatpush.bf16.msra.mxu0 0
    %1422 = vmatpush.bf16.msra.mxu0 0
    %1423 = vmatpush.bf16.msra.mxu0 0
    %1424 = vmatpush.bf16.msra.mxu0 %v1045
    %1425 = vmatmul.bf16.gmra.mxu0 %v1246
    %v1426 = vpop.f32.mrf.mxu0
    %v1427 = vadd.f32 %v1414, %v1426
    %v1428 = vpop.f32.mrf.mxu0
    %1429 = vdwg.mxu0
    %1430 = vmatpush.bf16.msra.mxu0 %v882
    %1431 = vmatpush.bf16.msra.mxu0 %v878
    %1432 = vmatpush.bf16.msra.mxu0 %v874
    %1433 = vmatpush.bf16.msra.mxu0 %v870
    %1434 = vmatpush.bf16.msra.mxu0 %v866
    %1435 = vmatpush.bf16.msra.mxu0 %v862
    %1436 = vmatpush.bf16.msra.mxu0 %v858
    %1437 = vmatpush.bf16.msra.mxu0 %v854
    %1438 = vmatmul.bf16.gmra.mxu0 %v51
    %v1439 = vpop.f32.mrf.mxu0
    %v1440 = vadd.f32 %v258, %v1439
    %v1441 = vpop.f32.mrf.mxu0
    %1442 = vdwg.mxu0
    %1443 = vmatpush.bf16.msra.mxu0 %v914
    %1444 = vmatpush.bf16.msra.mxu0 %v910
    %1445 = vmatpush.bf16.msra.mxu0 %v906
    %1446 = vmatpush.bf16.msra.mxu0 %v902
    %1447 = vmatpush.bf16.msra.mxu0 %v898
    %1448 = vmatpush.bf16.msra.mxu0 %v894
    %1449 = vmatpush.bf16.msra.mxu0 %v890
    %1450 = vmatpush.bf16.msra.mxu0 %v886
    %1451 = vmatmul.bf16.gmra.mxu0 %v52
    %v1452 = vpop.f32.mrf.mxu0
    %v1453 = vadd.f32 %v1440, %v1452
    %v1454 = vpop.f32.mrf.mxu0
    %1455 = vdwg.mxu0
    %1456 = vmatpush.bf16.msra.mxu0 %v946
    %1457 = vmatpush.bf16.msra.mxu0 %v942
    %1458 = vmatpush.bf16.msra.mxu0 %v938
    %1459 = vmatpush.bf16.msra.mxu0 %v934
    %1460 = vmatpush.bf16.msra.mxu0 %v930
    %1461 = vmatpush.bf16.msra.mxu0 %v926
    %1462 = vmatpush.bf16.msra.mxu0 %v922
    %1463 = vmatpush.bf16.msra.mxu0 %v918
    %1464 = vmatmul.bf16.gmra.mxu0 %v53
    %v1465 = vpop.f32.mrf.mxu0
    %v1466 = vadd.f32 %v1453, %v1465
    %v1467 = vpop.f32.mrf.mxu0
    %1468 = vdwg.mxu0
    %1469 = vmatpush.bf16.msra.mxu0 %v978
    %1470 = vmatpush.bf16.msra.mxu0 %v974
    %1471 = vmatpush.bf16.msra.mxu0 %v970
    %1472 = vmatpush.bf16.msra.mxu0 %v966
    %1473 = vmatpush.bf16.msra.mxu0 %v962
    %1474 = vmatpush.bf16.msra.mxu0 %v958
    %1475 = vmatpush.bf16.msra.mxu0 %v954
    %1476 = vmatpush.bf16.msra.mxu0 %v950
    %1477 = vmatmul.bf16.gmra.mxu0 %v54
    %v1478 = vpop.f32.mrf.mxu0
    %v1479 = vadd.f32 %v1466, %v1478
    %v1480 = vpop.f32.mrf.mxu0
    %1481 = vdwg.mxu0
    %1482 = vmatpush.bf16.msra.mxu0 %v1010
    %1483 = vmatpush.bf16.msra.mxu0 %v1006
    %1484 = vmatpush.bf16.msra.mxu0 %v1002
    %1485 = vmatpush.bf16.msra.mxu0 %v998
    %1486 = vmatpush.bf16.msra.mxu0 %v994
    %1487 = vmatpush.bf16.msra.mxu0 %v990
    %1488 = vmatpush.bf16.msra.mxu0 %v986
    %1489 = vmatpush.bf16.msra.mxu0 %v982
    %1490 = vmatmul.bf16.gmra.mxu0 %v55
    %v1491 = vpop.f32.mrf.mxu0
    %v1492 = vadd.f32 %v1479, %v1491
    %v1493 = vpop.f32.mrf.mxu0
    %1494 = vdwg.mxu0
    %1495 = vmatpush.bf16.msra.mxu0 %v1042
    %1496 = vmatpush.bf16.msra.mxu0 %v1038
    %1497 = vmatpush.bf16.msra.mxu0 %v1034
    %1498 = vmatpush.bf16.msra.mxu0 %v1030
    %1499 = vmatpush.bf16.msra.mxu0 %v1026
    %1500 = vmatpush.bf16.msra.mxu0 %v1022
    %1501 = vmatpush.bf16.msra.mxu0 %v1018
    %1502 = vmatpush.bf16.msra.mxu0 %v1014
    %1503 = vmatmul.bf16.gmra.mxu0 %v56
    %v1504 = vpop.f32.mrf.mxu0
    %v1505 = vadd.f32 %v1492, %v1504
    %v1506 = vpop.f32.mrf.mxu0
    %1507 = vdwg.mxu0
    %1508 = vmatpush.bf16.msra.mxu0 0
    %1509 = vmatpush.bf16.msra.mxu0 0
    %1510 = vmatpush.bf16.msra.mxu0 0
    %1511 = vmatpush.bf16.msra.mxu0 0
    %1512 = vmatpush.bf16.msra.mxu0 0
    %1513 = vmatpush.bf16.msra.mxu0 0
    %1514 = vmatpush.bf16.msra.mxu0 0
    %1515 = vmatpush.bf16.msra.mxu0 %v1046
    %1516 = vmatmul.bf16.gmra.mxu0 %v1246
    %v1517 = vpop.f32.mrf.mxu0
    %v1518 = vadd.f32 %v1505, %v1517
    %v1519 = vpop.f32.mrf.mxu0
    %1520 = vdwg.mxu0
    %1521 = vmatpush.bf16.msra.mxu0 %v883
    %1522 = vmatpush.bf16.msra.mxu0 %v879
    %1523 = vmatpush.bf16.msra.mxu0 %v875
    %1524 = vmatpush.bf16.msra.mxu0 %v871
    %1525 = vmatpush.bf16.msra.mxu0 %v867
    %1526 = vmatpush.bf16.msra.mxu0 %v863
    %1527 = vmatpush.bf16.msra.mxu0 %v859
    %1528 = vmatpush.bf16.msra.mxu0 %v855
    %1529 = vmatmul.bf16.gmra.mxu0 %v51
    %v1530 = vpop.f32.mrf.mxu0
    %v1531 = vadd.f32 %v259, %v1530
    %v1532 = vpop.f32.mrf.mxu0
    %1533 = vdwg.mxu0
    %1534 = vmatpush.bf16.msra.mxu0 %v915
    %1535 = vmatpush.bf16.msra.mxu0 %v911
    %1536 = vmatpush.bf16.msra.mxu0 %v907
    %1537 = vmatpush.bf16.msra.mxu0 %v903
    %1538 = vmatpush.bf16.msra.mxu0 %v899
    %1539 = vmatpush.bf16.msra.mxu0 %v895
    %1540 = vmatpush.bf16.msra.mxu0 %v891
    %1541 = vmatpush.bf16.msra.mxu0 %v887
    %1542 = vmatmul.bf16.gmra.mxu0 %v52
    %v1543 = vpop.f32.mrf.mxu0
    %v1544 = vadd.f32 %v1531, %v1543
    %v1545 = vpop.f32.mrf.mxu0
    %1546 = vdwg.mxu0
    %1547 = vmatpush.bf16.msra.mxu0 %v947
    %1548 = vmatpush.bf16.msra.mxu0 %v943
    %1549 = vmatpush.bf16.msra.mxu0 %v939
    %1550 = vmatpush.bf16.msra.mxu0 %v935
    %1551 = vmatpush.bf16.msra.mxu0 %v931
    %1552 = vmatpush.bf16.msra.mxu0 %v927
    %1553 = vmatpush.bf16.msra.mxu0 %v923
    %1554 = vmatpush.bf16.msra.mxu0 %v919
    %1555 = vmatmul.bf16.gmra.mxu0 %v53
    %v1556 = vpop.f32.mrf.mxu0
    %v1557 = vadd.f32 %v1544, %v1556
    %v1558 = vpop.f32.mrf.mxu0
    %1559 = vdwg.mxu0
    %1560 = vmatpush.bf16.msra.mxu0 %v979
    %1561 = vmatpush.bf16.msra.mxu0 %v975
    %1562 = vmatpush.bf16.msra.mxu0 %v971
    %1563 = vmatpush.bf16.msra.mxu0 %v967
    %1564 = vmatpush.bf16.msra.mxu0 %v963
    %1565 = vmatpush.bf16.msra.mxu0 %v959
    %1566 = vmatpush.bf16.msra.mxu0 %v955
    %1567 = vmatpush.bf16.msra.mxu0 %v951
    %1568 = vmatmul.bf16.gmra.mxu0 %v54
    %v1569 = vpop.f32.mrf.mxu0
    %v1570 = vadd.f32 %v1557, %v1569
    %v1571 = vpop.f32.mrf.mxu0
    %1572 = vdwg.mxu0
    %1573 = vmatpush.bf16.msra.mxu0 %v1011
    %1574 = vmatpush.bf16.msra.mxu0 %v1007
    %1575 = vmatpush.bf16.msra.mxu0 %v1003
    %1576 = vmatpush.bf16.msra.mxu0 %v999
    %1577 = vmatpush.bf16.msra.mxu0 %v995
    %1578 = vmatpush.bf16.msra.mxu0 %v991
    %1579 = vmatpush.bf16.msra.mxu0 %v987
    %1580 = vmatpush.bf16.msra.mxu0 %v983
    %1581 = vmatmul.bf16.gmra.mxu0 %v55
    %v1582 = vpop.f32.mrf.mxu0
    %v1583 = vadd.f32 %v1570, %v1582
    %v1584 = vpop.f32.mrf.mxu0
    %1585 = vdwg.mxu0
    %1586 = vmatpush.bf16.msra.mxu0 %v1043
    %1587 = vmatpush.bf16.msra.mxu0 %v1039
    %1588 = vmatpush.bf16.msra.mxu0 %v1035
    %1589 = vmatpush.bf16.msra.mxu0 %v1031
    %1590 = vmatpush.bf16.msra.mxu0 %v1027
    %1591 = vmatpush.bf16.msra.mxu0 %v1023
    %1592 = vmatpush.bf16.msra.mxu0 %v1019
    %1593 = vmatpush.bf16.msra.mxu0 %v1015
    %1594 = vmatmul.bf16.gmra.mxu0 %v56
    %v1595 = vpop.f32.mrf.mxu0
    %v1596 = vadd.f32 %v1583, %v1595
    %v1597 = vpop.f32.mrf.mxu0
    %1598 = vdwg.mxu0
    %1599 = vmatpush.bf16.msra.mxu0 0
    %1600 = vmatpush.bf16.msra.mxu0 0
    %1601 = vmatpush.bf16.msra.mxu0 0
    %1602 = vmatpush.bf16.msra.mxu0 0
    %1603 = vmatpush.bf16.msra.mxu0 0
    %1604 = vmatpush.bf16.msra.mxu0 0
    %1605 = vmatpush.bf16.msra.mxu0 0
    %1606 = vmatpush.bf16.msra.mxu0 %v1047
    %1607 = vmatmul.bf16.gmra.mxu0 %v1246
    %v1608 = vpop.f32.mrf.mxu0
    %v1609 = vadd.f32 %v1596, %v1608
    %v1610 = vpop.f32.mrf.mxu0
    %1611 = vdwg.mxu0
    %v1612 = vmax.f32 %v1336, 0.0
    %v1613 = vmax.f32 %v1427, 0.0
    %v1614 = vmax.f32 %v1518, 0.0
    %v1615 = vmax.f32 %v1609, 0.0
    %v1616 = vpack.c.bf16 %v1612, %v1612
    %v1617 = vpack.c.bf16 %v1613, %v1613
    %v1618 = vpack.c.bf16 %v1614, %v1614
    %v1619 = vpack.c.bf16 %v1615, %v1615
    %v1620 = vld [vmem:[%s3] sm:$0xff]
    %v1621 = vld [vmem:[%s3 + $0x8] sm:$0xff]
    %v1622 = vld [vmem:[%s3 + $0x10] sm:$0xff]
    %v1623 = vld [vmem:[%s3 + $0x18] sm:$0xff]
    %v1624 = vld [vmem:[%s3 + $0x20] sm:$0xff]
    %v1625 = vld [vmem:[%s3 + $0x28] sm:$0xff]
    %v1626 = vld [vmem:[%s3 + $0x30] sm:$0xff]
    %v1627 = vld [vmem:[%s3 + $0x38] sm:$0xff]
    %v1628 = vld [vmem:[%s3 + $0x40] sm:$0xff]
    %v1629 = vld [vmem:[%s3 + $0x48] sm:$0xff]
    %v1630 = vld [vmem:[%s3 + $0x50] sm:$0xff]
    %v1631 = vld [vmem:[%s3 + $0x58] sm:$0xff]
    %v1632 = vld [vmem:[%s3 + $0x60] sm:$0xff]
    %v1633 = vld [vmem:[%s3 + $0x68] sm:$0xff]
    %v1634 = vld [vmem:[%s3 + $0x70] sm:$0xff]
    %v1635 = vld [vmem:[%s3 + $0x78] sm:$0xff]
    %v1636 = vld [vmem:[%s3 + $0x80] sm:$0xff]
    %v1637 = vld [vmem:[%s3 + $0x88] sm:$0xff]
    %v1638 = vld [vmem:[%s3 + $0x90] sm:$0xff]
    %v1639 = vld [vmem:[%s3 + $0x98] sm:$0xff]
    %v1640 = vld [vmem:[%s3 + $0xa0] sm:$0xff]
    %v1641 = vld [vmem:[%s3 + $0xa8] sm:$0xff]
    %v1642 = vld [vmem:[%s3 + $0xb0] sm:$0xff]
    %v1643 = vld [vmem:[%s3 + $0xb8] sm:$0xff]
    %v1644 = vld [vmem:[%s3 + $0xc0] sm:$0xff]
    %v1645 = vld [vmem:[%s3 + $0xc8] sm:$0xff]
    %v1646 = vld [vmem:[%s3 + $0xd0] sm:$0xff]
    %v1647 = vld [vmem:[%s3 + $0xd8] sm:$0xff]
    %v1648 = vld [vmem:[%s3 + $0xe0] sm:$0xff]
    %v1649 = vld [vmem:[%s3 + $0xe8] sm:$0xff]
    %v1650 = vld [vmem:[%s3 + $0xf0] sm:$0xff]
    %v1651 = vld [vmem:[%s3 + $0xf8] sm:$0xff]
    %v1652 = vld [vmem:[%s3 + $0x100] sm:$0xff]
    %v1653 = vld [vmem:[%s3 + $0x108] sm:$0xff]
    %v1654 = vld [vmem:[%s3 + $0x110] sm:$0xff]
    %v1655 = vld [vmem:[%s3 + $0x118] sm:$0xff]
    %v1656 = vld [vmem:[%s3 + $0x120] sm:$0xff]
    %v1657 = vld [vmem:[%s3 + $0x128] sm:$0xff]
    %v1658 = vld [vmem:[%s3 + $0x130] sm:$0xff]
    %v1659 = vld [vmem:[%s3 + $0x138] sm:$0xff]
    %v1660 = vld [vmem:[%s3 + $0x140] sm:$0xff]
    %v1661 = vld [vmem:[%s3 + $0x148] sm:$0xff]
    %v1662 = vld [vmem:[%s3 + $0x150] sm:$0xff]
    %v1663 = vld [vmem:[%s3 + $0x158] sm:$0xff]
    %v1664 = vld [vmem:[%s3 + $0x160] sm:$0xff]
    %v1665 = vld [vmem:[%s3 + $0x168] sm:$0xff]
    %v1666 = vld [vmem:[%s3 + $0x170] sm:$0xff]
    %v1667 = vld [vmem:[%s3 + $0x178] sm:$0xff]
    %v1668 = vld [vmem:[%s3 + $0x180] sm:$0xff]
    %v1669 = vld [vmem:[%s3 + $0x188] sm:$0xff]
    %v1670 = vld [vmem:[%s3 + $0x190] sm:$0xff]
    %v1671 = vld [vmem:[%s3 + $0x198] sm:$0xff]
    %v1672 = vld [vmem:[%s3 + $0x1a0] sm:$0xff]
    %v1673 = vld [vmem:[%s3 + $0x1a8] sm:$0xff]
    %v1674 = vld [vmem:[%s3 + $0x1b0] sm:$0xff]
    %v1675 = vld [vmem:[%s3 + $0x1b8] sm:$0xff]
    %v1676 = vld [vmem:[%s3 + $0x1c0] sm:$0xff]
    %v1677 = vld [vmem:[%s3 + $0x1c8] sm:$0xff]
    %v1678 = vld [vmem:[%s3 + $0x1d0] sm:$0xff]
    %v1679 = vld [vmem:[%s3 + $0x1d8] sm:$0xff]
    %v1680 = vld [vmem:[%s3 + $0x1e0] sm:$0xff]
    %v1681 = vld [vmem:[%s3 + $0x1e8] sm:$0xff]
    %v1682 = vld [vmem:[%s3 + $0x1f0] sm:$0x33]
    %v1683 = vld [vmem:[%s4] sm:$0x3]
    %v1685 = vperm.slane %v1683, 0
    %v1686 = vperm.slane %v1683, 1
    %v1752 = vunpack.c.l.b16 %v1620
    %v1753 = vunpack.c.h.b16 %v1620
    %v1754 = vunpack.c.l.b16 %v1621
    %v1755 = vunpack.c.h.b16 %v1621
    %v1756 = vunpack.c.l.b16 %v1622
    %v1757 = vunpack.c.h.b16 %v1622
    %v1758 = vunpack.c.l.b16 %v1623
    %v1759 = vunpack.c.h.b16 %v1623
    %v1760 = vunpack.c.l.b16 %v1624
    %v1761 = vunpack.c.h.b16 %v1624
    %v1762 = vunpack.c.l.b16 %v1625
    %v1763 = vunpack.c.h.b16 %v1625
    %v1764 = vunpack.c.l.b16 %v1626
    %v1765 = vunpack.c.h.b16 %v1626
    %v1766 = vunpack.c.l.b16 %v1627
    %v1767 = vunpack.c.h.b16 %v1627
    %v1768 = vunpack.c.l.b16 %v1628
    %v1769 = vunpack.c.h.b16 %v1628
    %v1770 = vunpack.c.l.b16 %v1629
    %v1771 = vunpack.c.h.b16 %v1629
    %v1772 = vunpack.c.l.b16 %v1630
    %v1773 = vunpack.c.h.b16 %v1630
    %v1774 = vunpack.c.l.b16 %v1631
    %v1775 = vunpack.c.h.b16 %v1631
    %v1776 = vunpack.c.l.b16 %v1632
    %v1777 = vunpack.c.h.b16 %v1632
    %v1778 = vunpack.c.l.b16 %v1633
    %v1779 = vunpack.c.h.b16 %v1633
    %v1780 = vunpack.c.l.b16 %v1634
    %v1781 = vunpack.c.h.b16 %v1634
    %v1782 = vunpack.c.l.b16 %v1635
    %v1783 = vunpack.c.h.b16 %v1635
    %v1784 = vunpack.c.l.b16 %v1636
    %v1785 = vunpack.c.h.b16 %v1636
    %v1786 = vunpack.c.l.b16 %v1637
    %v1787 = vunpack.c.h.b16 %v1637
    %v1788 = vunpack.c.l.b16 %v1638
    %v1789 = vunpack.c.h.b16 %v1638
    %v1790 = vunpack.c.l.b16 %v1639
    %v1791 = vunpack.c.h.b16 %v1639
    %v1792 = vunpack.c.l.b16 %v1640
    %v1793 = vunpack.c.h.b16 %v1640
    %v1794 = vunpack.c.l.b16 %v1641
    %v1795 = vunpack.c.h.b16 %v1641
    %v1796 = vunpack.c.l.b16 %v1642
    %v1797 = vunpack.c.h.b16 %v1642
    %v1798 = vunpack.c.l.b16 %v1643
    %v1799 = vunpack.c.h.b16 %v1643
    %v1800 = vunpack.c.l.b16 %v1644
    %v1801 = vunpack.c.h.b16 %v1644
    %v1802 = vunpack.c.l.b16 %v1645
    %v1803 = vunpack.c.h.b16 %v1645
    %v1804 = vunpack.c.l.b16 %v1646
    %v1805 = vunpack.c.h.b16 %v1646
    %v1806 = vunpack.c.l.b16 %v1647
    %v1807 = vunpack.c.h.b16 %v1647
    %v1808 = vunpack.c.l.b16 %v1648
    %v1809 = vunpack.c.h.b16 %v1648
    %v1810 = vunpack.c.l.b16 %v1649
    %v1811 = vunpack.c.h.b16 %v1649
    %v1812 = vunpack.c.l.b16 %v1650
    %v1813 = vunpack.c.h.b16 %v1650
    %v1814 = vunpack.c.l.b16 %v1651
    %v1815 = vunpack.c.h.b16 %v1651
    %v1816 = vunpack.c.l.b16 %v1652
    %v1817 = vunpack.c.h.b16 %v1652
    %v1818 = vunpack.c.l.b16 %v1653
    %v1819 = vunpack.c.h.b16 %v1653
    %v1820 = vunpack.c.l.b16 %v1654
    %v1821 = vunpack.c.h.b16 %v1654
    %v1822 = vunpack.c.l.b16 %v1655
    %v1823 = vunpack.c.h.b16 %v1655
    %v1824 = vunpack.c.l.b16 %v1656
    %v1825 = vunpack.c.h.b16 %v1656
    %v1826 = vunpack.c.l.b16 %v1657
    %v1827 = vunpack.c.h.b16 %v1657
    %v1828 = vunpack.c.l.b16 %v1658
    %v1829 = vunpack.c.h.b16 %v1658
    %v1830 = vunpack.c.l.b16 %v1659
    %v1831 = vunpack.c.h.b16 %v1659
    %v1832 = vunpack.c.l.b16 %v1660
    %v1833 = vunpack.c.h.b16 %v1660
    %v1834 = vunpack.c.l.b16 %v1661
    %v1835 = vunpack.c.h.b16 %v1661
    %v1836 = vunpack.c.l.b16 %v1662
    %v1837 = vunpack.c.h.b16 %v1662
    %v1838 = vunpack.c.l.b16 %v1663
    %v1839 = vunpack.c.h.b16 %v1663
    %v1840 = vunpack.c.l.b16 %v1664
    %v1841 = vunpack.c.h.b16 %v1664
    %v1842 = vunpack.c.l.b16 %v1665
    %v1843 = vunpack.c.h.b16 %v1665
    %v1844 = vunpack.c.l.b16 %v1666
    %v1845 = vunpack.c.h.b16 %v1666
    %v1846 = vunpack.c.l.b16 %v1667
    %v1847 = vunpack.c.h.b16 %v1667
    %v1848 = vunpack.c.l.b16 %v1668
    %v1849 = vunpack.c.h.b16 %v1668
    %v1850 = vunpack.c.l.b16 %v1669
    %v1851 = vunpack.c.h.b16 %v1669
    %v1852 = vunpack.c.l.b16 %v1670
    %v1853 = vunpack.c.h.b16 %v1670
    %v1854 = vunpack.c.l.b16 %v1671
    %v1855 = vunpack.c.h.b16 %v1671
    %v1856 = vunpack.c.l.b16 %v1672
    %v1857 = vunpack.c.h.b16 %v1672
    %v1858 = vunpack.c.l.b16 %v1673
    %v1859 = vunpack.c.h.b16 %v1673
    %v1860 = vunpack.c.l.b16 %v1674
    %v1861 = vunpack.c.h.b16 %v1674
    %v1862 = vunpack.c.l.b16 %v1675
    %v1863 = vunpack.c.h.b16 %v1675
    %v1864 = vunpack.c.l.b16 %v1676
    %v1865 = vunpack.c.h.b16 %v1676
    %v1866 = vunpack.c.l.b16 %v1677
    %v1867 = vunpack.c.h.b16 %v1677
    %v1868 = vunpack.c.l.b16 %v1678
    %v1869 = vunpack.c.h.b16 %v1678
    %v1870 = vunpack.c.l.b16 %v1679
    %v1871 = vunpack.c.h.b16 %v1679
    %v1872 = vunpack.c.l.b16 %v1680
    %v1873 = vunpack.c.h.b16 %v1680
    %v1874 = vunpack.c.l.b16 %v1681
    %v1875 = vunpack.c.h.b16 %v1681
    %v1876 = vunpack.c.l.b16 %v1682
    %v1877 = vunpack.c.h.b16 %v1682
    %v1878 = vpack.c.b16 %v1754, %v1752
    %v1879 = vpack.c.b16 %v1755, %v1753
    %v1880 = vpack.c.b16 %v1758, %v1756
    %v1881 = vpack.c.b16 %v1759, %v1757
    %v1882 = vpack.c.b16 %v1762, %v1760
    %v1883 = vpack.c.b16 %v1763, %v1761
    %v1884 = vpack.c.b16 %v1766, %v1764
    %v1885 = vpack.c.b16 %v1767, %v1765
    %v1886 = vpack.c.b16 %v1770, %v1768
    %v1887 = vpack.c.b16 %v1771, %v1769
    %v1888 = vpack.c.b16 %v1774, %v1772
    %v1889 = vpack.c.b16 %v1775, %v1773
    %v1890 = vpack.c.b16 %v1778, %v1776
    %v1891 = vpack.c.b16 %v1779, %v1777
    %v1892 = vpack.c.b16 %v1782, %v1780
    %v1893 = vpack.c.b16 %v1783, %v1781
    %v1894 = vpack.c.b16 %v1786, %v1784
    %v1895 = vpack.c.b16 %v1787, %v1785
    %v1896 = vpack.c.b16 %v1790, %v1788
    %v1897 = vpack.c.b16 %v1791, %v1789
    %v1898 = vpack.c.b16 %v1794, %v1792
    %v1899 = vpack.c.b16 %v1795, %v1793
    %v1900 = vpack.c.b16 %v1798, %v1796
    %v1901 = vpack.c.b16 %v1799, %v1797
    %v1902 = vpack.c.b16 %v1802, %v1800
    %v1903 = vpack.c.b16 %v1803, %v1801
    %v1904 = vpack.c.b16 %v1806, %v1804
    %v1905 = vpack.c.b16 %v1807, %v1805
    %v1906 = vpack.c.b16 %v1810, %v1808
    %v1907 = vpack.c.b16 %v1811, %v1809
    %v1908 = vpack.c.b16 %v1814, %v1812
    %v1909 = vpack.c.b16 %v1815, %v1813
    %v1910 = vpack.c.b16 %v1818, %v1816
    %v1911 = vpack.c.b16 %v1819, %v1817
    %v1912 = vpack.c.b16 %v1822, %v1820
    %v1913 = vpack.c.b16 %v1823, %v1821
    %v1914 = vpack.c.b16 %v1826, %v1824
    %v1915 = vpack.c.b16 %v1827, %v1825
    %v1916 = vpack.c.b16 %v1830, %v1828
    %v1917 = vpack.c.b16 %v1831, %v1829
    %v1918 = vpack.c.b16 %v1834, %v1832
    %v1919 = vpack.c.b16 %v1835, %v1833
    %v1920 = vpack.c.b16 %v1838, %v1836
    %v1921 = vpack.c.b16 %v1839, %v1837
    %v1922 = vpack.c.b16 %v1842, %v1840
    %v1923 = vpack.c.b16 %v1843, %v1841
    %v1924 = vpack.c.b16 %v1846, %v1844
    %v1925 = vpack.c.b16 %v1847, %v1845
    %v1926 = vpack.c.b16 %v1850, %v1848
    %v1927 = vpack.c.b16 %v1851, %v1849
    %v1928 = vpack.c.b16 %v1854, %v1852
    %v1929 = vpack.c.b16 %v1855, %v1853
    %v1930 = vpack.c.b16 %v1858, %v1856
    %v1931 = vpack.c.b16 %v1859, %v1857
    %v1932 = vpack.c.b16 %v1862, %v1860
    %v1933 = vpack.c.b16 %v1863, %v1861
    %v1934 = vpack.c.b16 %v1866, %v1864
    %v1935 = vpack.c.b16 %v1867, %v1865
    %v1936 = vpack.c.b16 %v1870, %v1868
    %v1937 = vpack.c.b16 %v1871, %v1869
    %v1938 = vpack.c.b16 %v1874, %v1872
    %v1939 = vpack.c.b16 %v1875, %v1873
    %v1940 = vpack.c.b16 %v1876, %v1876
    %v1941 = vpack.c.b16 %v1877, %v1877
    %vm2004 = vcmask 949248
    %v2006 = vsel %vm2004, %v1619, 0
    %vm2008 = vcmask 1041408
    %v2010 = vsel %vm2008, %v1940, 0
    %v2013 = vsel %vm2008, %v1941, 0
    %2015 = vmatpush.bf16.msra.mxu0 %v1892
    %2016 = vmatpush.bf16.msra.mxu0 %v1890
    %2017 = vmatpush.bf16.msra.mxu0 %v1888
    %2018 = vmatpush.bf16.msra.mxu0 %v1886
    %2019 = vmatpush.bf16.msra.mxu0 %v1884
    %2020 = vmatpush.bf16.msra.mxu0 %v1882
    %2021 = vmatpush.bf16.msra.mxu0 %v1880
    %2022 = vmatpush.bf16.msra.mxu0 %v1878
    %2023 = vmatmul.bf16.gmra.mxu0 %v1616
    %v2024 = vpop.f32.mrf.mxu0
    %v2025 = vadd.f32 %v1685, %v2024
    %v2026 = vpop.f32.mrf.mxu0
    %2027 = vdwg.mxu0
    %2028 = vmatpush.bf16.msra.mxu0 %v1908
    %2029 = vmatpush.bf16.msra.mxu0 %v1906
    %2030 = vmatpush.bf16.msra.mxu0 %v1904
    %2031 = vmatpush.bf16.msra.mxu0 %v1902
    %2032 = vmatpush.bf16.msra.mxu0 %v1900
    %2033 = vmatpush.bf16.msra.mxu0 %v1898
    %2034 = vmatpush.bf16.msra.mxu0 %v1896
    %2035 = vmatpush.bf16.msra.mxu0 %v1894
    %2036 = vmatmul.bf16.gmra.mxu0 %v1617
    %v2037 = vpop.f32.mrf.mxu0
    %v2038 = vadd.f32 %v2025, %v2037
    %v2039 = vpop.f32.mrf.mxu0
    %2040 = vdwg.mxu0
    %2041 = vmatpush.bf16.msra.mxu0 %v1924
    %2042 = vmatpush.bf16.msra.mxu0 %v1922
    %2043 = vmatpush.bf16.msra.mxu0 %v1920
    %2044 = vmatpush.bf16.msra.mxu0 %v1918
    %2045 = vmatpush.bf16.msra.mxu0 %v1916
    %2046 = vmatpush.bf16.msra.mxu0 %v1914
    %2047 = vmatpush.bf16.msra.mxu0 %v1912
    %2048 = vmatpush.bf16.msra.mxu0 %v1910
    %2049 = vmatmul.bf16.gmra.mxu0 %v1618
    %v2050 = vpop.f32.mrf.mxu0
    %v2051 = vadd.f32 %v2038, %v2050
    %v2052 = vpop.f32.mrf.mxu0
    %2053 = vdwg.mxu0
    %2054 = vmatpush.bf16.msra.mxu0 %v2010
    %2055 = vmatpush.bf16.msra.mxu0 %v1938
    %2056 = vmatpush.bf16.msra.mxu0 %v1936
    %2057 = vmatpush.bf16.msra.mxu0 %v1934
    %2058 = vmatpush.bf16.msra.mxu0 %v1932
    %2059 = vmatpush.bf16.msra.mxu0 %v1930
    %2060 = vmatpush.bf16.msra.mxu0 %v1928
    %2061 = vmatpush.bf16.msra.mxu0 %v1926
    %2062 = vmatmul.bf16.gmra.mxu0 %v2006
    %v2063 = vpop.f32.mrf.mxu0
    %v2064 = vadd.f32 %v2051, %v2063
    %v2065 = vpop.f32.mrf.mxu0
    %2066 = vdwg.mxu0
    %2067 = vmatpush.bf16.msra.mxu0 %v1893
    %2068 = vmatpush.bf16.msra.mxu0 %v1891
    %2069 = vmatpush.bf16.msra.mxu0 %v1889
    %2070 = vmatpush.bf16.msra.mxu0 %v1887
    %2071 = vmatpush.bf16.msra.mxu0 %v1885
    %2072 = vmatpush.bf16.msra.mxu0 %v1883
    %2073 = vmatpush.bf16.msra.mxu0 %v1881
    %2074 = vmatpush.bf16.msra.mxu0 %v1879
    %2075 = vmatmul.bf16.gmra.mxu0 %v1616
    %v2076 = vpop.f32.mrf.mxu0
    %v2077 = vadd.f32 %v1686, %v2076
    %v2078 = vpop.f32.mrf.mxu0
    %2079 = vdwg.mxu0
    %2080 = vmatpush.bf16.msra.mxu0 %v1909
    %2081 = vmatpush.bf16.msra.mxu0 %v1907
    %2082 = vmatpush.bf16.msra.mxu0 %v1905
    %2083 = vmatpush.bf16.msra.mxu0 %v1903
    %2084 = vmatpush.bf16.msra.mxu0 %v1901
    %2085 = vmatpush.bf16.msra.mxu0 %v1899
    %2086 = vmatpush.bf16.msra.mxu0 %v1897
    %2087 = vmatpush.bf16.msra.mxu0 %v1895
    %2088 = vmatmul.bf16.gmra.mxu0 %v1617
    %v2089 = vpop.f32.mrf.mxu0
    %v2090 = vadd.f32 %v2077, %v2089
    %v2091 = vpop.f32.mrf.mxu0
    %2092 = vdwg.mxu0
    %2093 = vmatpush.bf16.msra.mxu0 %v1925
    %2094 = vmatpush.bf16.msra.mxu0 %v1923
    %2095 = vmatpush.bf16.msra.mxu0 %v1921
    %2096 = vmatpush.bf16.msra.mxu0 %v1919
    %2097 = vmatpush.bf16.msra.mxu0 %v1917
    %2098 = vmatpush.bf16.msra.mxu0 %v1915
    %2099 = vmatpush.bf16.msra.mxu0 %v1913
    %2100 = vmatpush.bf16.msra.mxu0 %v1911
    %2101 = vmatmul.bf16.gmra.mxu0 %v1618
    %v2102 = vpop.f32.mrf.mxu0
    %v2103 = vadd.f32 %v2090, %v2102
    %v2104 = vpop.f32.mrf.mxu0
    %2105 = vdwg.mxu0
    %2106 = vmatpush.bf16.msra.mxu0 %v2013
    %2107 = vmatpush.bf16.msra.mxu0 %v1939
    %2108 = vmatpush.bf16.msra.mxu0 %v1937
    %2109 = vmatpush.bf16.msra.mxu0 %v1935
    %2110 = vmatpush.bf16.msra.mxu0 %v1933
    %2111 = vmatpush.bf16.msra.mxu0 %v1931
    %2112 = vmatpush.bf16.msra.mxu0 %v1929
    %2113 = vmatpush.bf16.msra.mxu0 %v1927
    %2114 = vmatmul.bf16.gmra.mxu0 %v2006
    %v2115 = vpop.f32.mrf.mxu0
    %v2116 = vadd.f32 %v2103, %v2115
    %v2117 = vpop.f32.mrf.mxu0
    %2118 = vdwg.mxu0
    %v2119 = vmax.f32 %v2064, 0.0
    %v2120 = vmax.f32 %v2116, 0.0
    %v2121 = vpack.c.bf16 %v2119, %v2119
    %v2122 = vpack.c.bf16 %v2120, %v2120
    %v2123 = vld [vmem:[%s5] sm:$0xf]
    %v2124 = vld [vmem:[%s5 + $0x4] sm:$0xf]
    %v2125 = vld [vmem:[%s5 + $0x8] sm:$0xf]
    %v2126 = vld [vmem:[%s5 + $0xc] sm:$0xf]
    %v2127 = vld [vmem:[%s5 + $0x10] sm:$0xf]
    %v2128 = vld [vmem:[%s5 + $0x14] sm:$0xf]
    %v2129 = vld [vmem:[%s5 + $0x18] sm:$0xf]
    %v2130 = vld [vmem:[%s5 + $0x1c] sm:$0xf]
    %v2131 = vld [vmem:[%s5 + $0x20] sm:$0xf]
    %v2132 = vld [vmem:[%s5 + $0x24] sm:$0xf]
    %v2133 = vld [vmem:[%s5 + $0x28] sm:$0xf]
    %v2134 = vld [vmem:[%s5 + $0x2c] sm:$0xf]
    %v2135 = vld [vmem:[%s5 + $0x30] sm:$0xf]
    %v2136 = vld [vmem:[%s5 + $0x34] sm:$0xf]
    %v2137 = vld [vmem:[%s5 + $0x38] sm:$0xf]
    %v2138 = vld [vmem:[%s5 + $0x3c] sm:$0xf]
    %v2139 = vld [vmem:[%s5 + $0x40] sm:$0xf]
    %v2140 = vld [vmem:[%s5 + $0x44] sm:$0xf]
    %v2141 = vld [vmem:[%s5 + $0x48] sm:$0xf]
    %v2142 = vld [vmem:[%s5 + $0x4c] sm:$0xf]
    %v2143 = vld [vmem:[%s5 + $0x50] sm:$0xf]
    %v2144 = vld [vmem:[%s5 + $0x54] sm:$0xf]
    %v2145 = vld [vmem:[%s5 + $0x58] sm:$0xf]
    %v2146 = vld [vmem:[%s5 + $0x5c] sm:$0xf]
    %v2147 = vld [vmem:[%s5 + $0x60] sm:$0xf]
    %v2148 = vld [vmem:[%s6] sm:$0x1]
    %v2150 = vperm.slane %v2148, 0
    %v2177 = vunpack.c.l.b16 %v2123
    %v2178 = vunpack.c.l.b16 %v2124
    %v2179 = vunpack.c.l.b16 %v2125
    %v2180 = vunpack.c.l.b16 %v2126
    %v2181 = vunpack.c.l.b16 %v2127
    %v2182 = vunpack.c.l.b16 %v2128
    %v2183 = vunpack.c.l.b16 %v2129
    %v2184 = vunpack.c.l.b16 %v2130
    %v2185 = vunpack.c.l.b16 %v2131
    %v2186 = vunpack.c.l.b16 %v2132
    %v2187 = vunpack.c.l.b16 %v2133
    %v2188 = vunpack.c.l.b16 %v2134
    %v2189 = vunpack.c.l.b16 %v2135
    %v2190 = vunpack.c.l.b16 %v2136
    %v2191 = vunpack.c.l.b16 %v2137
    %v2192 = vunpack.c.l.b16 %v2138
    %v2193 = vunpack.c.l.b16 %v2139
    %v2194 = vunpack.c.l.b16 %v2140
    %v2195 = vunpack.c.l.b16 %v2141
    %v2196 = vunpack.c.l.b16 %v2142
    %v2197 = vunpack.c.l.b16 %v2143
    %v2198 = vunpack.c.l.b16 %v2144
    %v2199 = vunpack.c.l.b16 %v2145
    %v2200 = vunpack.c.l.b16 %v2146
    %v2201 = vunpack.c.l.b16 %v2147
    %v2202 = vpack.c.b16 %v2178, %v2177
    %v2203 = vpack.c.b16 %v2180, %v2179
    %v2204 = vpack.c.b16 %v2182, %v2181
    %v2205 = vpack.c.b16 %v2184, %v2183
    %v2206 = vpack.c.b16 %v2186, %v2185
    %v2207 = vpack.c.b16 %v2188, %v2187
    %v2208 = vpack.c.b16 %v2190, %v2189
    %v2209 = vpack.c.b16 %v2192, %v2191
    %v2210 = vpack.c.b16 %v2194, %v2193
    %v2211 = vpack.c.b16 %v2196, %v2195
    %v2212 = vpack.c.b16 %v2198, %v2197
    %v2213 = vpack.c.b16 %v2200, %v2199
    %v2214 = vpack.c.b16 %v2201, %v2201
    %vm2227 = vcmask 588800
    %v2229 = vsel %vm2227, %v2122, 0
    %vm2231 = vcmask 1043456
    %v2233 = vsel %vm2231, %v2214, 0
    %2235 = vmatpush.bf16.msra.mxu0 %v2209
    %2236 = vmatpush.bf16.msra.mxu0 %v2208
    %2237 = vmatpush.bf16.msra.mxu0 %v2207
    %2238 = vmatpush.bf16.msra.mxu0 %v2206
    %2239 = vmatpush.bf16.msra.mxu0 %v2205
    %2240 = vmatpush.bf16.msra.mxu0 %v2204
    %2241 = vmatpush.bf16.msra.mxu0 %v2203
    %2242 = vmatpush.bf16.msra.mxu0 %v2202
    %2243 = vmatmul.bf16.gmra.mxu0 %v2121
    %v2244 = vpop.f32.mrf.mxu0
    %v2245 = vadd.f32 %v2150, %v2244
    %v2246 = vpop.f32.mrf.mxu0
    %2247 = vdwg.mxu0
    %2248 = vmatpush.bf16.msra.mxu0 0
    %2249 = vmatpush.bf16.msra.mxu0 0
    %2250 = vmatpush.bf16.msra.mxu0 0
    %2251 = vmatpush.bf16.msra.mxu0 %v2233
    %2252 = vmatpush.bf16.msra.mxu0 %v2213
    %2253 = vmatpush.bf16.msra.mxu0 %v2212
    %2254 = vmatpush.bf16.msra.mxu0 %v2211
    %2255 = vmatpush.bf16.msra.mxu0 %v2210
    %2256 = vmatmul.bf16.gmra.mxu0 %v2229
    %v2257 = vpop.f32.mrf.mxu0
    %v2258 = vadd.f32 %v2245, %v2257
    %v2259 = vpop.f32.mrf.mxu0
    %2260 = vdwg.mxu0
    %vm2261 = vcmask 80896
    %2262 = vst.msk [vmem:[#allocation5] sm:$0xff] %vm2261, %v2258
    // Predicated region
    $region34: #{tpu_custom_call.1} parent=1 // pred_check
      _
    $region35: #{tpu_custom_call.1} parent=1 // pred_check_branch
      %2264 = sbr.rel (0) target = $region37
    $region36: #{tpu_custom_call.1} parent=1 // pred_region
      %2266 = vsyncadd [#allocation4], 0
      %s2268 = sshll.u32 [#allocation5], 4
      %s2269 = int_to_ptr.vmem [resolvable:$true] %s2268
      %s2270 = sshll.u32 %s7, 4
      %s2271 = int_to_ptr.hbm [resolvable:$true] %s2270
      %2273 = dma.vmem_to_hbm [thread:$0]  %s2269, 128, %s2271, [#allocation4]
    $region37: #{tpu_custom_call.1} parent=1 // pred_fallthru
      _
    // Predicated region
    $region38: #{tpu_custom_call.1} parent=1 // pred_check
      _
    $region39: #{tpu_custom_call.1} parent=1 // pred_check_branch
      %2275 = sbr.rel (0) target = $region41
    $region40: #{tpu_custom_call.1} parent=1 // pred_region
      %2277 = dma.done [#allocation4], 128
    $region41: #{tpu_custom_call.1} parent=1 // pred_fallthru
      _
    %2278 = vsyncpa [#allocation3], 1
    %2279 = vsyncpa [#allocation4], 1

</llo_original>
